<compile_context>
chip_gen: v7x
topology: tpu7x:2x2x1
jax: 0.10.0
libtpu: 0.0.40
codegen_flags: <defaults>
</compile_context>

<pallas_src>
import functools
import math

import jax
import jax.numpy as jnp
from jax.experimental import pallas as pl
from jax.experimental.pallas import tpu as pltpu


# --------------------------------- kernels -----------------------------------

def _input_proj_kernel(x_ref, w_ref, b_ref, o_ref):
    """(TM, I) @ (I, TN) + (1, TN) -> (TM, TN).  All four gates packed along TN."""
    o_ref[...] = (jnp.dot(x_ref[...], w_ref[...],
                          preferred_element_type=jnp.float32)
                  + b_ref[...]).astype(o_ref.dtype)


def _lstm_step_kernel(xw_ref, whh_ref, y_ref, hn_ref, cn_ref, h_sc, c_sc, *, hidden):
    """One time step.  xw_ref: (1, B, 4H) precomputed input projection for step t.
    whh_ref: (H, 4H).  h/c carried in VMEM scratch across the sequential time grid."""
    t = pl.program_id(0)

    @pl.when(t == 0)
    def _():
        h_sc[...] = jnp.zeros_like(h_sc)
        c_sc[...] = jnp.zeros_like(c_sc)

    h_prev = h_sc[...]                                   # (B, H) f32
    c_prev = c_sc[...]                                   # (B, H) f32

    # Packed recurrent matmul: all four gates in one lane-dense (B, 4H) result.
    gates = xw_ref[0] + jnp.dot(h_prev, whh_ref[...],
                                preferred_element_type=jnp.float32)

    H = hidden
    i_g = jax.nn.sigmoid(gates[:, 0 * H:1 * H])
    f_g = jax.nn.sigmoid(gates[:, 1 * H:2 * H])
    g_g = jnp.tanh(gates[:, 2 * H:3 * H])
    o_g = jax.nn.sigmoid(gates[:, 3 * H:4 * H])

    c_new = f_g * c_prev + i_g * g_g
    h_new = o_g * jnp.tanh(c_new)

    c_sc[...] = c_new
    h_sc[...] = h_new

    y_ref[0] = h_new.astype(y_ref.dtype)
    hn_ref[...] = h_new.astype(hn_ref.dtype)             # resident output block; final
    cn_ref[...] = c_new.astype(cn_ref.dtype)             # value flushed after last step


# --------------------------------- wrappers ----------------------------------

def _pick_tile(n, candidates):
    for c in candidates:
        if c <= n and n % c == 0:
            return c
    return n  # fall back to full extent (always legal: block == array dim)


def input_projection(x2d, w_ih_t, bias):
    """x2d: (N, I) time-major rows.  Returns (N, 4H) = x @ W_ih^T + (b_ih + b_hh)."""
    N, I = x2d.shape
    G = w_ih_t.shape[1]                                  # 4H (multiple of 128 here)
    TM = _pick_tile(N, (512, 256, 128, 64, 32, 16, 8))
    TN = _pick_tile(G, (512, 256, 128))
    grid = (N // TM, G // TN)
    flops = 2 * N * I * G
    bytes_accessed = 4 * (N * I + I * G + N * G + G)
    return pl.pallas_call(
        _input_proj_kernel,
        grid=grid,
        in_specs=[
            pl.BlockSpec((TM, I), lambda i, j: (i, 0)),
            pl.BlockSpec((I, TN), lambda i, j: (0, j)),
            pl.BlockSpec((1, TN), lambda i, j: (0, j)),
        ],
        out_specs=pl.BlockSpec((TM, TN), lambda i, j: (i, j)),
        out_shape=jax.ShapeDtypeStruct((N, G), jnp.float32),
        compiler_params=pltpu.CompilerParams(
            dimension_semantics=("parallel", "parallel"),
            vmem_limit_bytes=64 << 20),
        cost_estimate=pl.CostEstimate(flops=flops, transcendentals=0,
                                      bytes_accessed=bytes_accessed),
    )(x2d, w_ih_t, bias)


def lstm_layer_recurrence(xw, w_hh_t, *, hidden):
    """xw: (T, B, 4H) precomputed input projections.  w_hh_t: (H, 4H).
    Returns (y (T,B,H), h_n (B,H), c_n (B,H))."""
    T, B, G = xw.shape
    H = hidden
    kern = functools.partial(_lstm_step_kernel, hidden=H)
    flops = 2 * T * B * H * G + 10 * T * B * H
    transc = 4 * T * B * H
    bytes_accessed = 4 * (T * B * G + H * G + T * B * H + 2 * B * H)
    # TODO(synk): for hidden_dim=4096, W_hh (H,4H) f32 is 256 MiB and must be
    # hidden-tiled (extra "arbitrary" gate-column grid axis + ping-pong h scratch)
    # and/or cast to bf16 to fit v7x's 64 MiB VMEM; kept resident here for demo sizes.
    return pl.pallas_call(
        kern,
        grid_spec=pltpu.PrefetchScalarGridSpec(
            num_scalar_prefetch=0,
            grid=(T,),
            in_specs=[
                pl.BlockSpec((1, B, G), lambda t: (t, 0, 0)),
                pl.BlockSpec((H, G), lambda t: (0, 0)),
            ],
            out_specs=(
                pl.BlockSpec((1, B, H), lambda t: (t, 0, 0)),
                pl.BlockSpec((B, H), lambda t: (0, 0)),
                pl.BlockSpec((B, H), lambda t: (0, 0)),
            ),
            scratch_shapes=[
                pltpu.VMEM((B, H), jnp.float32),   # h carry
                pltpu.VMEM((B, H), jnp.float32),   # c carry
            ],
        ),
        out_shape=(
            jax.ShapeDtypeStruct((T, B, H), jnp.float32),
            jax.ShapeDtypeStruct((B, H), jnp.float32),
            jax.ShapeDtypeStruct((B, H), jnp.float32),
        ),
        compiler_params=pltpu.CompilerParams(
            dimension_semantics=("arbitrary",),
            vmem_limit_bytes=64 << 20),
        cost_estimate=pl.CostEstimate(flops=flops, transcendentals=transc,
                                      bytes_accessed=bytes_accessed),
    )(xw, w_hh_t)


def lstm_forward(x, params):
    """x: (B, T, input_dim) batch-first.  Returns (output (B,T,H), (h_n, c_n))."""
    B, T, _ = x.shape
    layer_in = jnp.transpose(x, (1, 0, 2))               # (T, B, I) time-major
    h_ns, c_ns = [], []
    for lp in params["layers"]:
        I = layer_in.shape[-1]
        H = lp["w_hh_t"].shape[0]
        xw = input_projection(layer_in.reshape(T * B, I), lp["w_ih_t"], lp["bias"])
        xw = xw.reshape(T, B, 4 * H)
        y, hn, cn = lstm_layer_recurrence(xw, lp["w_hh_t"], hidden=H)
        h_ns.append(hn)
        c_ns.append(cn)
        layer_in = y
    output = jnp.transpose(layer_in, (1, 0, 2))          # (B, T, H) batch-first
    h_n = jnp.stack(h_ns, axis=0)                        # (num_layers, B, H)
    c_n = jnp.stack(c_ns, axis=0)
    return output, (h_n, c_n)


# ------------------------------- param init ----------------------------------

def init_params(key, input_dim, hidden_dim, num_layers):
    """PyTorch LSTM init: uniform(-1/sqrt(H), 1/sqrt(H)); gate order [i|f|g|o]."""
    bound = 1.0 / math.sqrt(hidden_dim)
    layers = []
    in_dim = input_dim
    for lkey in jax.random.split(key, num_layers):
        k1, k2, k3, k4 = jax.random.split(lkey, 4)
        w_ih = jax.random.uniform(k1, (4 * hidden_dim, in_dim), jnp.float32, -bound, bound)
        w_hh = jax.random.uniform(k2, (4 * hidden_dim, hidden_dim), jnp.float32, -bound, bound)
        b_ih = jax.random.uniform(k3, (4 * hidden_dim,), jnp.float32, -bound, bound)
        b_hh = jax.random.uniform(k4, (4 * hidden_dim,), jnp.float32, -bound, bound)
        layers.append(dict(
            w_ih_t=jnp.transpose(w_ih),                          # (in, 4H)
            w_hh_t=jnp.transpose(w_hh),                          # (H, 4H)
            bias=(b_ih + b_hh).reshape(1, 4 * hidden_dim),       # folded biases
        ))
        in_dim = hidden_dim
    return dict(layers=layers)


# ----------------------------------- main -------------------------------------

if __name__ == "__main__":
    # Small demo shapes consistent with the module (input_dim kept at 144; the
    # 4096 default hidden size is scaled down to 256 for the smoke test).
    B, T = 2, 8
    input_dim, hidden_dim, num_layers = 144, 256, 3

    key = jax.random.PRNGKey(0)
    kx, kp = jax.random.split(key)
    x = jax.random.normal(kx, (B, T, input_dim), dtype=jnp.float32)
    params = init_params(kp, input_dim, hidden_dim, num_layers)

    fwd = jax.jit(lstm_forward)
    out, (h_n, c_n) = fwd(x, params)
    jax.block_until_ready(out)

    assert out.shape == (B, T, hidden_dim)
    assert h_n.shape == (num_layers, B, hidden_dim)
    assert c_n.shape == (num_layers, B, hidden_dim)
    assert bool(jnp.all(jnp.isfinite(out)))
    assert bool(jnp.all(jnp.isfinite(h_n))) and bool(jnp.all(jnp.isfinite(c_n)))
    print("KERNEL_OK")
</pallas_src>

<mosaic_0001>
module attributes {stable_mosaic.version = 11 : i64} {
  func.func @_input_proj_kernel(%arg0: i32, %arg1: i32, %arg2: memref<16x144xf32, #tpu.memory_space<vmem>>, %arg3: memref<144x512xf32, #tpu.memory_space<vmem>>, %arg4: memref<1x512xf32, #tpu.memory_space<vmem>>, %arg5: memref<16x512xf32, #tpu.memory_space<vmem>>) attributes {dimension_semantics = [#tpu.dimension_semantics<parallel>, #tpu.dimension_semantics<parallel>], iteration_bounds = array<i64: 1, 2>, scalar_prefetch = 0 : i64, scratch_operands = 0 : i64, tpu.core_type = #tpu.core_type<tc>, window_params = [{transform_indices = @transform_0, window_bounds = array<i64: 16, 144>}, {transform_indices = @transform_1, window_bounds = array<i64: 144, 512>}, {transform_indices = @transform_2, window_bounds = array<i64: 1, 512>}, {transform_indices = @transform_3, window_bounds = array<i64: 16, 512>}]} {
    %c0 = arith.constant 0 : index
    %c0_0 = arith.constant 0 : index
    %0 = vector.load %arg2[%c0, %c0_0] : memref<16x144xf32, #tpu.memory_space<vmem>>, vector<16x144xf32>
    %c0_1 = arith.constant 0 : index
    %c0_2 = arith.constant 0 : index
    %1 = vector.load %arg3[%c0_1, %c0_2] : memref<144x512xf32, #tpu.memory_space<vmem>>, vector<144x512xf32>
    %cst = arith.constant dense<0.000000e+00> : vector<16x512xf32>
    %2 = tpu.matmul %0, %1, %cst {dimension_numbers = #tpu.dot_dimension_numbers<[1], [0], [0], [1], [0, 0, 1, 1], [], []>} : vector<16x144xf32>, vector<144x512xf32>, vector<16x512xf32> -> vector<16x512xf32>
    %c0_3 = arith.constant 0 : index
    %c0_4 = arith.constant 0 : index
    %3 = vector.load %arg4[%c0_3, %c0_4] : memref<1x512xf32, #tpu.memory_space<vmem>>, vector<1x512xf32>
    %4 = vector.broadcast %3 : vector<1x512xf32> to vector<16x512xf32>
    %5 = arith.addf %2, %4 : vector<16x512xf32>
    %c0_5 = arith.constant 0 : index
    %c0_6 = arith.constant 0 : index
    %6 = vector.load %arg5[%c0_5, %c0_6] : memref<16x512xf32, #tpu.memory_space<vmem>>, vector<16x512xf32>
    tpu.vector_store %arg5[%c0_5, %c0_6], %5 {strides = array<i32>} : memref<16x512xf32, #tpu.memory_space<vmem>>, vector<16x512xf32>,
    return
  }
  func.func @transform_0(%arg0: i32, %arg1: i32) -> (i32, i32) {
    %c0_i32 = arith.constant 0 : i32
    %c0_i32_0 = arith.constant 0 : i32
    return %arg0, %c0_i32 : i32, i32
  }
  func.func @transform_1(%arg0: i32, %arg1: i32) -> (i32, i32) {
    %c0_i32 = arith.constant 0 : i32
    %c0_i32_0 = arith.constant 0 : i32
    return %c0_i32, %arg1 : i32, i32
  }
  func.func @transform_2(%arg0: i32, %arg1: i32) -> (i32, i32) {
    %c0_i32 = arith.constant 0 : i32
    %c0_i32_0 = arith.constant 0 : i32
    return %c0_i32, %arg1 : i32, i32
  }
  func.func @transform_3(%arg0: i32, %arg1: i32) -> (i32, i32) {
    %c0_i32 = arith.constant 0 : i32
    return %arg0, %arg1 : i32, i32
  }
}

module attributes {stable_mosaic.version = 11 : i64} {
  func.func @_input_proj_kernel(%arg0: i32, %arg1: i32, %arg2: memref<16x256xf32, #tpu.memory_space<vmem>>, %arg3: memref<256x512xf32, #tpu.memory_space<vmem>>, %arg4: memref<1x512xf32, #tpu.memory_space<vmem>>, %arg5: memref<16x512xf32, #tpu.memory_space<vmem>>) attributes {dimension_semantics = [#tpu.dimension_semantics<parallel>, #tpu.dimension_semantics<parallel>], iteration_bounds = array<i64: 1, 2>, scalar_prefetch = 0 : i64, scratch_operands = 0 : i64, tpu.core_type = #tpu.core_type<tc>, window_params = [{transform_indices = @transform_0, window_bounds = array<i64: 16, 256>}, {transform_indices = @transform_1, window_bounds = array<i64: 256, 512>}, {transform_indices = @transform_2, window_bounds = array<i64: 1, 512>}, {transform_indices = @transform_3, window_bounds = array<i64: 16, 512>}]} {
    %c0 = arith.constant 0 : index
    %c0_0 = arith.constant 0 : index
    %0 = vector.load %arg2[%c0, %c0_0] : memref<16x256xf32, #tpu.memory_space<vmem>>, vector<16x256xf32>
    %c0_1 = arith.constant 0 : index
    %c0_2 = arith.constant 0 : index
    %1 = vector.load %arg3[%c0_1, %c0_2] : memref<256x512xf32, #tpu.memory_space<vmem>>, vector<256x512xf32>
    %cst = arith.constant dense<0.000000e+00> : vector<16x512xf32>
    %2 = tpu.matmul %0, %1, %cst {dimension_numbers = #tpu.dot_dimension_numbers<[1], [0], [0], [1], [0, 0, 1, 1], [], []>} : vector<16x256xf32>, vector<256x512xf32>, vector<16x512xf32> -> vector<16x512xf32>
    %c0_3 = arith.constant 0 : index
    %c0_4 = arith.constant 0 : index
    %3 = vector.load %arg4[%c0_3, %c0_4] : memref<1x512xf32, #tpu.memory_space<vmem>>, vector<1x512xf32>
    %4 = vector.broadcast %3 : vector<1x512xf32> to vector<16x512xf32>
    %5 = arith.addf %2, %4 : vector<16x512xf32>
    %c0_5 = arith.constant 0 : index
    %c0_6 = arith.constant 0 : index
    %6 = vector.load %arg5[%c0_5, %c0_6] : memref<16x512xf32, #tpu.memory_space<vmem>>, vector<16x512xf32>
    tpu.vector_store %arg5[%c0_5, %c0_6], %5 {strides = array<i32>} : memref<16x512xf32, #tpu.memory_space<vmem>>, vector<16x512xf32>,
    return
  }
  func.func @transform_0(%arg0: i32, %arg1: i32) -> (i32, i32) {
    %c0_i32 = arith.constant 0 : i32
    %c0_i32_0 = arith.constant 0 : i32
    return %arg0, %c0_i32 : i32, i32
  }
  func.func @transform_1(%arg0: i32, %arg1: i32) -> (i32, i32) {
    %c0_i32 = arith.constant 0 : i32
    %c0_i32_0 = arith.constant 0 : i32
    return %c0_i32, %arg1 : i32, i32
  }
  func.func @transform_2(%arg0: i32, %arg1: i32) -> (i32, i32) {
    %c0_i32 = arith.constant 0 : i32
    %c0_i32_0 = arith.constant 0 : i32
    return %c0_i32, %arg1 : i32, i32
  }
  func.func @transform_3(%arg0: i32, %arg1: i32) -> (i32, i32) {
    %c0_i32 = arith.constant 0 : i32
    return %arg0, %arg1 : i32, i32
  }
}

module attributes {stable_mosaic.version = 11 : i64} {
  func.func @_lstm_step_kernel(%arg0: i32, %arg1: memref<1x2x1024xf32, #tpu.memory_space<vmem>>, %arg2: memref<256x1024xf32, #tpu.memory_space<vmem>>, %arg3: memref<1x2x256xf32, #tpu.memory_space<vmem>>, %arg4: memref<2x256xf32, #tpu.memory_space<vmem>>, %arg5: memref<2x256xf32, #tpu.memory_space<vmem>>, %arg6: memref<2x256xf32, #tpu.memory_space<vmem>>, %arg7: memref<2x256xf32, #tpu.memory_space<vmem>>) attributes {dimension_semantics = [#tpu.dimension_semantics<arbitrary>], iteration_bounds = array<i64: 8>, scalar_prefetch = 0 : i64, scratch_operands = 2 : i64, tpu.core_type = #tpu.core_type<tc>, window_params = [{transform_indices = @transform_0, window_bounds = array<i64: 1, 2, 1024>}, {pipeline_mode = #tpu.pipeline_mode<synchronous>, transform_indices = @transform_1, window_bounds = array<i64: 256, 1024>}, {transform_indices = @transform_2, window_bounds = array<i64: 1, 2, 256>}, {pipeline_mode = #tpu.pipeline_mode<synchronous>, transform_indices = @transform_3, window_bounds = array<i64: 2, 256>}, {pipeline_mode = #tpu.pipeline_mode<synchronous>, transform_indices = @transform_4, window_bounds = array<i64: 2, 256>}]} {
    %c0_i32 = arith.constant 0 : i32
    %0 = arith.cmpi eq, %arg0, %c0_i32 : i32
    %1 = arith.extui %0 : i1 to i32
    %c0_i32_0 = arith.constant 0 : i32
    %2 = arith.cmpi ne, %1, %c0_i32_0 : i32
    scf.if %2 {
      %cst_23 = arith.constant 0.000000e+00 : f32
      %42 = vector.broadcast %cst_23 : f32 to vector<2x256xf32>
      %c0_24 = arith.constant 0 : index
      %c0_25 = arith.constant 0 : index
      %43 = vector.load %arg6[%c0_24, %c0_25] : memref<2x256xf32, #tpu.memory_space<vmem>>, vector<2x256xf32>
      tpu.vector_store %arg6[%c0_24, %c0_25], %42 {strides = array<i32>} : memref<2x256xf32, #tpu.memory_space<vmem>>, vector<2x256xf32>,
      %cst_26 = arith.constant 0.000000e+00 : f32
      %44 = vector.broadcast %cst_26 : f32 to vector<2x256xf32>
      %c0_27 = arith.constant 0 : index
      %c0_28 = arith.constant 0 : index
      %45 = vector.load %arg7[%c0_27, %c0_28] : memref<2x256xf32, #tpu.memory_space<vmem>>, vector<2x256xf32>
      tpu.vector_store %arg7[%c0_27, %c0_28], %44 {strides = array<i32>} : memref<2x256xf32, #tpu.memory_space<vmem>>, vector<2x256xf32>,
    } else {
    }
    %c0 = arith.constant 0 : index
    %c0_1 = arith.constant 0 : index
    %3 = vector.load %arg6[%c0, %c0_1] : memref<2x256xf32, #tpu.memory_space<vmem>>, vector<2x256xf32>
    %c0_2 = arith.constant 0 : index
    %c0_3 = arith.constant 0 : index
    %4 = vector.load %arg7[%c0_2, %c0_3] : memref<2x256xf32, #tpu.memory_space<vmem>>, vector<2x256xf32>
    %c0_4 = arith.constant 0 : index
    %c0_5 = arith.constant 0 : index
    %c0_6 = arith.constant 0 : index
    %5 = vector.load %arg1[%c0_4, %c0_5, %c0_6] : memref<1x2x1024xf32, #tpu.memory_space<vmem>>, vector<1x2x1024xf32>
    %6 = vector.shape_cast %5 : vector<1x2x1024xf32> to vector<2x1024xf32>
    %c0_7 = arith.constant 0 : index
    %c0_8 = arith.constant 0 : index
    %7 = vector.load %arg2[%c0_7, %c0_8] : memref<256x1024xf32, #tpu.memory_space<vmem>>, vector<256x1024xf32>
    %cst = arith.constant dense<0.000000e+00> : vector<2x1024xf32>
    %8 = tpu.matmul %3, %7, %cst {dimension_numbers = #tpu.dot_dimension_numbers<[1], [0], [0], [1], [0, 0, 1, 1], [], []>} : vector<2x256xf32>, vector<256x1024xf32>, vector<2x1024xf32> -> vector<2x1024xf32>
    %9 = arith.addf %6, %8 : vector<2x1024xf32>
    %10 = vector.extract_strided_slice %9 {offsets = [0, 0], sizes = [2, 256], strides = [1, 1]} : vector<2x1024xf32> to vector<2x256xf32>
    %11 = arith.negf %10 : vector<2x256xf32>
    %12 = math.exp %11 : vector<2x256xf32>
    %cst_9 = arith.constant 1.000000e+00 : f32
    %13 = vector.broadcast %cst_9 : f32 to vector<2x256xf32>
    %14 = arith.addf %13, %12 : vector<2x256xf32>
    %15 = arith.divf %13, %14 : vector<2x256xf32>
    %16 = vector.extract_strided_slice %9 {offsets = [0, 256], sizes = [2, 256], strides = [1, 1]} : vector<2x1024xf32> to vector<2x256xf32>
    %17 = arith.negf %16 : vector<2x256xf32>
    %18 = math.exp %17 : vector<2x256xf32>
    %cst_10 = arith.constant 1.000000e+00 : f32
    %19 = vector.broadcast %cst_10 : f32 to vector<2x256xf32>
    %20 = arith.addf %19, %18 : vector<2x256xf32>
    %21 = arith.divf %19, %20 : vector<2x256xf32>
    %22 = vector.extract_strided_slice %9 {offsets = [0, 512], sizes = [2, 256], strides = [1, 1]} : vector<2x1024xf32> to vector<2x256xf32>
    %23 = math.tanh %22 : vector<2x256xf32>
    %24 = vector.extract_strided_slice %9 {offsets = [0, 768], sizes = [2, 256], strides = [1, 1]} : vector<2x1024xf32> to vector<2x256xf32>
    %25 = arith.negf %24 : vector<2x256xf32>
    %26 = math.exp %25 : vector<2x256xf32>
    %cst_11 = arith.constant 1.000000e+00 : f32
    %27 = vector.broadcast %cst_11 : f32 to vector<2x256xf32>
    %28 = arith.addf %27, %26 : vector<2x256xf32>
    %29 = arith.divf %27, %28 : vector<2x256xf32>
    %30 = arith.mulf %21, %4 : vector<2x256xf32>
    %31 = arith.mulf %15, %23 : vector<2x256xf32>
    %32 = arith.addf %30, %31 : vector<2x256xf32>
    %33 = math.tanh %32 : vector<2x256xf32>
    %34 = arith.mulf %29, %33 : vector<2x256xf32>
    %c0_12 = arith.constant 0 : index
    %c0_13 = arith.constant 0 : index
    %35 = vector.load %arg7[%c0_12, %c0_13] : memref<2x256xf32, #tpu.memory_space<vmem>>, vector<2x256xf32>
    tpu.vector_store %arg7[%c0_12, %c0_13], %32 {strides = array<i32>} : memref<2x256xf32, #tpu.memory_space<vmem>>, vector<2x256xf32>,
    %c0_14 = arith.constant 0 : index
    %c0_15 = arith.constant 0 : index
    %36 = vector.load %arg6[%c0_14, %c0_15] : memref<2x256xf32, #tpu.memory_space<vmem>>, vector<2x256xf32>
    tpu.vector_store %arg6[%c0_14, %c0_15], %34 {strides = array<i32>} : memref<2x256xf32, #tpu.memory_space<vmem>>, vector<2x256xf32>,
    %c0_16 = arith.constant 0 : index
    %c0_17 = arith.constant 0 : index
    %c0_18 = arith.constant 0 : index
    %37 = vector.load %arg3[%c0_16, %c0_17, %c0_18] : memref<1x2x256xf32, #tpu.memory_space<vmem>>, vector<1x2x256xf32>
    %38 = vector.shape_cast %37 : vector<1x2x256xf32> to vector<2x256xf32>
    %39 = vector.shape_cast %34 : vector<2x256xf32> to vector<1x2x256xf32>
    tpu.vector_store %arg3[%c0_16, %c0_17, %c0_18], %39 {strides = array<i32>} : memref<1x2x256xf32, #tpu.memory_space<vmem>>, vector<1x2x256xf32>,
    %c0_19 = arith.constant 0 : index
    %c0_20 = arith.constant 0 : index
    %40 = vector.load %arg4[%c0_19, %c0_20] : memref<2x256xf32, #tpu.memory_space<vmem>>, vector<2x256xf32>
    tpu.vector_store %arg4[%c0_19, %c0_20], %34 {strides = array<i32>} : memref<2x256xf32, #tpu.memory_space<vmem>>, vector<2x256xf32>,
    %c0_21 = arith.constant 0 : index
    %c0_22 = arith.constant 0 : index
    %41 = vector.load %arg5[%c0_21, %c0_22] : memref<2x256xf32, #tpu.memory_space<vmem>>, vector<2x256xf32>
    tpu.vector_store %arg5[%c0_21, %c0_22], %32 {strides = array<i32>} : memref<2x256xf32, #tpu.memory_space<vmem>>, vector<2x256xf32>,
    return
  }
  func.func @transform_0(%arg0: i32) -> (i32, i32, i32) {
    %c0_i32 = arith.constant 0 : i32
    %c0_i32_0 = arith.constant 0 : i32
    %c0_i32_1 = arith.constant 0 : i32
    return %arg0, %c0_i32, %c0_i32_0 : i32, i32, i32
  }
  func.func @transform_1(%arg0: i32) -> (i32, i32) {
    %c0_i32 = arith.constant 0 : i32
    %c0_i32_0 = arith.constant 0 : i32
    %c0_i32_1 = arith.constant 0 : i32
    return %c0_i32, %c0_i32_0 : i32, i32
  }
  func.func @transform_2(%arg0: i32) -> (i32, i32, i32) {
    %c0_i32 = arith.constant 0 : i32
    %c0_i32_0 = arith.constant 0 : i32
    %c0_i32_1 = arith.constant 0 : i32
    return %arg0, %c0_i32, %c0_i32_0 : i32, i32, i32
  }
  func.func @transform_3(%arg0: i32) -> (i32, i32) {
    %c0_i32 = arith.constant 0 : i32
    %c0_i32_0 = arith.constant 0 : i32
    %c0_i32_1 = arith.constant 0 : i32
    return %c0_i32, %c0_i32_0 : i32, i32
  }
  func.func @transform_4(%arg0: i32) -> (i32, i32) {
    %c0_i32 = arith.constant 0 : i32
    %c0_i32_0 = arith.constant 0 : i32
    %c0_i32_1 = arith.constant 0 : i32
    return %c0_i32, %c0_i32_0 : i32, i32
  }
}

</mosaic_0001>

<llo_original>
// kernel: lstm_forward.6
$region0: #{lstm_forward.6}
  #allocation0 [shape = 'u32[]', space=smem, size = 0x4, offset = 0x4, fixed_abs, tag = 'smem constant byte address 0x4 - core index']
  #allocation1 [shape = 'u32[144,128]{1,0:T(1,128)}', space=vmem, size = 0x12000, scoped, tag = 'internal scratch']
  %s0 = inlined_call_operand.hbm [shape: f32[16,144], index: 0, kind: input, shape index: {}]
  %s1 = inlined_call_operand.hbm [shape: f32[144,1024], index: 1, kind: input, shape index: {}]
  %s2 = inlined_call_operand.hbm [shape: f32[1,1024], index: 2, kind: input, shape index: {}]
  %s3 = inlined_call_operand.hbm [shape: f32[16,1024], index: 3, kind: output, shape index: {}]
  %s4 = sld [smem:[#allocation0]]
  $region57: #{lstm_forward.6} parent=0
    _
  %s6 = ssub.s32 1, %s4
  %s7 = scalar_select 0, %s6, %s4
  $region1: #{lstm_forward.6} parent=0
    #allocation2 [shape = 'u8[16384]{0}', space=vmem, size = 0x4000, scoped, tag = 'input window, operand 0, single buffered']
    #allocation3 [shape = 's32[2]{0}', space=sflag, size = 0x8, scoped, tag = 'scoped memory for lstm_forward.6']
    #allocation4 [shape = 's32[2]{0}', space=sflag, size = 0x8, scoped, tag = 'scoped memory for lstm_forward.6']
    #allocation5 [shape = 'u8[589824]{0}', space=vmem, size = 0x90000, scoped, tag = 'input window, operand 1']
    #allocation6 [shape = 's32[2]{0}', space=sflag, size = 0x8, scoped, tag = 'scoped memory for lstm_forward.6']
    #allocation7 [shape = 'u8[4096]{0}', space=vmem, size = 0x1000, scoped, tag = 'input window, operand 2']
    #allocation8 [shape = 'u8[65536]{0}', space=vmem, size = 0x10000, scoped, tag = 'output window, operand 0']
    %8 = vsyncpa [#allocation3], 0
    %9 = vsyncpa [#allocation6], 0
    %s10 = scalar_lea.sflag [#allocation6], 1
    %11 = vsyncpa %s10, 0
    %12 = vsyncpa [#allocation4], 0
    %s13 = scalar_lea.sflag [#allocation4], 1
    %14 = vsyncpa %s13, 0
    loop: start=0, step=1, limit=4
    $region2: #{lstm_forward.6} parent=1 // loop_pre_header
      _
    $region3: #{lstm_forward.6} parent=1 // loop_header
      %s16 = sphi 0, %s20
      %p17 = scmp.ge.s32.totalorder %s16, 4
      %s23 = sphi 0, %s35
      %s24 = sphi 0, %s31
      %s25 = sphi 0, %s23
      %s26 = sphi 0, %s24
      %s27 = sphi 0, %s25
      %s28 = sphi 0, %s26
      %s38 = sphi 0, %s40
      %s41 = sphi 0, %s38
      %s42 = sphi 0, %s41
      %s58 = sphi 0, %s42
      %s64 = sphi 0, %s66
      %s67 = sphi 0, %s64
      %s68 = sphi 0, %s67
      %s84 = sphi 0, %s68
      %s90 = sphi 0, %s92
      %s93 = sphi 0, %s90
      %s94 = sphi 0, %s93
      %s110 = sphi 0, %s94
      %s118 = sphi 0, %s120
      %s121 = sphi 0, %s118
      %s122 = sphi 0, %s121
      %s138 = sphi 0, %s122
    $region4: #{lstm_forward.6} parent=1 // loop_header_branch
      %19 = sbr.rel (%p17) target = $region8
    $region5: #{lstm_forward.6} parent=1 // loop_body
      %s21 = ssub.s32 %s16, 1
      %s22 = ssub.s32 %s16, 2
      %s29 = sadd.s32 1, %s24
      %p30 = scmp.ge.s32.totalorder %s29, 2
      %s31 = scalar_select %p30, 0, %s29
      %s32 = sadd.s32 1, %s23
      %s33 = scalar_select %p30, %s32, %s23
      %p34 = scmp.ge.s32.totalorder %s33, 1
      %s35 = scalar_select %p34, 0, %s33
      %s36 = ssub.s32 %s23, %s35
      %p37 = scmp.eq.s32.totalorder %s36, 0
      %s39 = sadd.s32 %s38, 1
      %s40 = scalar_select %p37, %s38, %s39
      %p43 = pneg %p37
      %p44 = scmp.eq.s32.totalorder %s16, 1
      %p45 = por %p43, %p44
      %p46 = scmp.ne.s32.totalorder %s38, %s41
      %p47 = scmp.eq.s32.totalorder %s16, 0
      %p48 = por %p46, %p47
      %p49 = scmp.ne.s32.totalorder %s38, %s41
      %p50 = scmp.eq.s32.totalorder %s21, 1
      %p51 = por %p49, %p50
      %p52 = scmp.ne.s32.totalorder %s41, %s42
      %p53 = scmp.eq.s32.totalorder %s21, 0
      %p54 = por %p52, %p53
      %p55 = scmp.ne.s32.totalorder %s41, %s42
      %p56 = scmp.eq.s32.totalorder %s22, 1
      %p57 = por %p55, %p56
      %p59 = scmp.ne.s32.totalorder %s42, %s58
      %p60 = scmp.eq.s32.totalorder %s22, 0
      %p61 = por %p59, %p60
      %s62 = ssub.s32 %s24, %s31
      %p63 = scmp.eq.s32.totalorder %s62, 0
      %s65 = sadd.s32 %s64, 1
      %s66 = scalar_select %p63, %s64, %s65
      %p69 = pneg %p63
      %p70 = scmp.eq.s32.totalorder %s16, 1
      %p71 = por %p69, %p70
      %p72 = scmp.ne.s32.totalorder %s64, %s67
      %p73 = scmp.eq.s32.totalorder %s16, 0
      %p74 = por %p72, %p73
      %p75 = scmp.ne.s32.totalorder %s64, %s67
      %p76 = scmp.eq.s32.totalorder %s21, 1
      %p77 = por %p75, %p76
      %p78 = scmp.ne.s32.totalorder %s67, %s68
      %p79 = scmp.eq.s32.totalorder %s21, 0
      %p80 = por %p78, %p79
      %p81 = scmp.ne.s32.totalorder %s67, %s68
      %p82 = scmp.eq.s32.totalorder %s22, 1
      %p83 = por %p81, %p82
      %p85 = scmp.ne.s32.totalorder %s68, %s84
      %p86 = scmp.eq.s32.totalorder %s22, 0
      %p87 = por %p85, %p86
      %s88 = ssub.s32 %s24, %s31
      %p89 = scmp.eq.s32.totalorder %s88, 0
      %s91 = sadd.s32 %s90, 1
      %s92 = scalar_select %p89, %s90, %s91
      %p95 = pneg %p89
      %p96 = scmp.eq.s32.totalorder %s16, 1
      %p97 = por %p95, %p96
      %p98 = scmp.ne.s32.totalorder %s90, %s93
      %p99 = scmp.eq.s32.totalorder %s16, 0
      %p100 = por %p98, %p99
      %p101 = scmp.ne.s32.totalorder %s90, %s93
      %p102 = scmp.eq.s32.totalorder %s21, 1
      %p103 = por %p101, %p102
      %p104 = scmp.ne.s32.totalorder %s93, %s94
      %p105 = scmp.eq.s32.totalorder %s21, 0
      %p106 = por %p104, %p105
      %p107 = scmp.ne.s32.totalorder %s93, %s94
      %p108 = scmp.eq.s32.totalorder %s22, 1
      %p109 = por %p107, %p108
      %p111 = scmp.ne.s32.totalorder %s94, %s110
      %p112 = scmp.eq.s32.totalorder %s22, 0
      %p113 = por %p111, %p112
      %s114 = ssub.s32 %s23, %s35
      %s115 = ssub.s32 %s24, %s31
      %s116 = sor.u32 %s114, %s115
      %p117 = scmp.eq.s32.totalorder %s116, 0
      %s119 = sadd.s32 %s118, 1
      %s120 = scalar_select %p117, %s118, %s119
      %p123 = pneg %p117
      %p124 = scmp.eq.s32.totalorder %s16, 1
      %p125 = por %p123, %p124
      %p126 = scmp.ne.s32.totalorder %s118, %s121
      %p127 = scmp.eq.s32.totalorder %s16, 0
      %p128 = por %p126, %p127
      %p129 = scmp.ne.s32.totalorder %s118, %s121
      %p130 = scmp.eq.s32.totalorder %s21, 1
      %p131 = por %p129, %p130
      %p132 = scmp.ne.s32.totalorder %s121, %s122
      %p133 = scmp.eq.s32.totalorder %s21, 0
      %p134 = por %p132, %p133
      %p135 = scmp.ne.s32.totalorder %s121, %s122
      %p136 = scmp.eq.s32.totalorder %s22, 1
      %p137 = por %p135, %p136
      %p139 = scmp.ne.s32.totalorder %s122, %s138
      %p140 = scmp.eq.s32.totalorder %s22, 0
      %p141 = por %p139, %p140
      %p142 = scmp.le.s32.totalorder 1, %s16
      %p143 = scmp.lt.s32.totalorder %s16, 3
      %p144 = pnand %p142, %p143
      %p145 = pneg %p144
      // Predicated region
      $region9: #{lstm_forward.6} parent=5 // pred_check
        _
      $region10: #{lstm_forward.6} parent=5 // pred_check_branch
        %147 = sbr.rel (%p144) target = $region12
      $region11: #{lstm_forward.6} parent=5 // pred_region
        %s148 = ssub.s32 %s16, 1
        // Predicated region
        $region13: #{lstm_forward.6} parent=11 // pred_check
          %p149 = pneg %p54
        $region14: #{lstm_forward.6} parent=11 // pred_check_branch
          %151 = sbr.rel (%p149) target = $region16
        $region15: #{lstm_forward.6} parent=11 // pred_region
          %s152 = smul.u32 2, %s25
          %s154 = ssub.s32 512, 512
          %155 = vsyncadd [#allocation3], %s154
          %s156 = smul.addr %s152, 2
          %s157 = smul.addr %s156, 128
          %s158 = scalar_lea.hbm %s0, %s157
          %s159 = sshll.u32 [#allocation2], 4
          %s160 = int_to_ptr.vmem [resolvable:$true] %s159
          %165 = dma.hbm_to_vmem [thread:$0]  %s158, 512, %s160, [#allocation3], 256, 256, 16
        $region16: #{lstm_forward.6} parent=11 // pred_fallthru
          _
      $region12: #{lstm_forward.6} parent=5 // pred_fallthru
        _
      %p166 = scmp.lt.s32.totalorder %s16, 2
      // Predicated region
      $region17: #{lstm_forward.6} parent=5 // pred_check
        %p167 = pneg %p166
      $region18: #{lstm_forward.6} parent=5 // pred_check_branch
        %169 = sbr.rel (%p167) target = $region20
      $region19: #{lstm_forward.6} parent=5 // pred_region
        // Predicated region
        $region21: #{lstm_forward.6} parent=19 // pred_check
          %p170 = pneg %p74
        $region22: #{lstm_forward.6} parent=19 // pred_check_branch
          %172 = sbr.rel (%p170) target = $region24
        $region23: #{lstm_forward.6} parent=19 // pred_region
          %s173 = sand.u32 %s16, 1
          %s174 = scalar_lea.sflag [#allocation6], %s173
          %s175 = sand.u32 %s64, 1
          %s176 = smul.addr %s175, 576
          %s177 = scalar_lea.vmem [#allocation5], %s176
          %s178 = smul.u32 4, %s24
          %s180 = ssub.s32 9216, 9216
          %181 = vsyncadd %s174, %s180
          %s182 = smul.addr %s178, 128
          %s183 = scalar_lea.hbm %s1, %s182
          %s184 = sshll.u32 %s177, 4
          %s185 = int_to_ptr.vmem [resolvable:$true] %s184
          %190 = dma.hbm_to_vmem [thread:$0]  %s183, 9216, %s185, %s174, 1024, 512, 32
        $region24: #{lstm_forward.6} parent=19 // pred_fallthru
          _
        // Predicated region
        $region25: #{lstm_forward.6} parent=19 // pred_check
          %p191 = pneg %p100
        $region26: #{lstm_forward.6} parent=19 // pred_check_branch
          %193 = sbr.rel (%p191) target = $region28
        $region27: #{lstm_forward.6} parent=19 // pred_region
          %s194 = sand.u32 %s16, 1
          %s195 = scalar_lea.sflag [#allocation6], %s194
          %s196 = sand.u32 %s90, 1
          %s197 = smul.addr %s196, 4
          %s198 = scalar_lea.vmem [#allocation7], %s197
          %s199 = smul.u32 4, %s24
          %s201 = ssub.s32 64, 64
          %202 = vsyncadd %s195, %s201
          %s203 = smul.addr %s199, 16
          %s204 = scalar_lea.hbm %s2, %s203
          %s206 = sshll.u32 %s198, 4
          %s207 = int_to_ptr.vmem [resolvable:$true] %s206
          %209 = dma.hbm_to_vmem [thread:$0]  %s204, 64, %s207, %s195
        $region28: #{lstm_forward.6} parent=19 // pred_fallthru
          _
      $region20: #{lstm_forward.6} parent=5 // pred_fallthru
        _
      %p210 = scmp.le.s32.totalorder 1, %s16
      %p211 = scmp.lt.s32.totalorder %s16, 3
      %p212 = pnand %p210, %p211
      %p213 = pneg %p212
      // Predicated region
      $region29: #{lstm_forward.6} parent=5 // pred_check
        _
      $region30: #{lstm_forward.6} parent=5 // pred_check_branch
        %215 = sbr.rel (%p212) target = $region32
      $region31: #{lstm_forward.6} parent=5 // pred_region
        %s216 = ssub.s32 %s16, 1
        // Predicated region
        $region33: #{lstm_forward.6} parent=31 // pred_check
          %p217 = pneg %p54
        $region34: #{lstm_forward.6} parent=31 // pred_check_branch
          %219 = sbr.rel (%p217) target = $region36
        $region35: #{lstm_forward.6} parent=31 // pred_region
          %220 = dma.done [#allocation3], 512
        $region36: #{lstm_forward.6} parent=31 // pred_fallthru
          _
        %s221 = sand.u32 %s21, 1
        %s222 = scalar_lea.sflag [#allocation6], %s221
        %s223 = sand.u32 %s67, 1
        %s224 = smul.addr %s223, 576
        %s225 = scalar_lea.vmem [#allocation5], %s224
        // Predicated region
        $region37: #{lstm_forward.6} parent=31 // pred_check
          %p226 = pneg %p80
        $region38: #{lstm_forward.6} parent=31 // pred_check_branch
          %228 = sbr.rel (%p226) target = $region40
        $region39: #{lstm_forward.6} parent=31 // pred_region
          %229 = dma.done %s222, 9216
        $region40: #{lstm_forward.6} parent=31 // pred_fallthru
          _
        %s230 = sand.u32 %s21, 1
        %s231 = scalar_lea.sflag [#allocation6], %s230
        %s232 = sand.u32 %s93, 1
        %s233 = smul.addr %s232, 4
        %s234 = scalar_lea.vmem [#allocation7], %s233
        // Predicated region
        $region41: #{lstm_forward.6} parent=31 // pred_check
          %p235 = pneg %p106
        $region42: #{lstm_forward.6} parent=31 // pred_check_branch
          %237 = sbr.rel (%p235) target = $region44
        $region43: #{lstm_forward.6} parent=31 // pred_region
          %238 = dma.done %s231, 64
        $region44: #{lstm_forward.6} parent=31 // pred_fallthru
          _
        %p239 = pneg %p54
        %p240 = pneg %p51
        %s241 = sand.u32 %s21, 1
        %s242 = scalar_lea.sflag [#allocation6], %s241
        %s243 = sand.u32 %s67, 1
        %s244 = smul.addr %s243, 576
        %s245 = scalar_lea.vmem [#allocation5], %s244
        %p246 = pneg %p80
        %p247 = pneg %p77
        %s248 = sand.u32 %s21, 1
        %s249 = scalar_lea.sflag [#allocation6], %s248
        %s250 = sand.u32 %s93, 1
        %s251 = smul.addr %s250, 4
        %s252 = scalar_lea.vmem [#allocation7], %s251
        %p253 = pneg %p106
        %p254 = pneg %p103
        %p255 = pneg %p134
        %p256 = pneg %p131
        %s257 = sand.u32 %s121, 1
        %s258 = scalar_lea.sflag [#allocation4], %s257
        %s259 = sand.u32 %s121, 1
        %s260 = smul.addr %s259, 64
        %s261 = scalar_lea.vmem [#allocation8], %s260
        %s262 = smul.u32 2, %s25
        %s263 = smul.u32 4, %s26
        %s264 = smul.u32 4, %s26
        %s265 = smul.u32 2, %s25
        %s266 = smul.u32 4, %s26
        %v267 = vld [vmem:[#allocation2] sm:$0xff]
        %v268 = vld [vmem:[#allocation2 + $0x8] sm:$0xff]
        %v269 = vld [vmem:[#allocation2 + $0x10] sm:$0xff]
        %v270 = vld [vmem:[#allocation2 + $0x18] sm:$0xff]
        %v271 = vld [vmem:[%s225] sm:$0xff]
        %v272 = vld [vmem:[%s225 + $0x8] sm:$0xff]
        %v273 = vld [vmem:[%s225 + $0x10] sm:$0xff]
        %v274 = vld [vmem:[%s225 + $0x18] sm:$0xff]
        %v275 = vld [vmem:[%s225 + $0x20] sm:$0xff]
        %v276 = vld [vmem:[%s225 + $0x28] sm:$0xff]
        %v277 = vld [vmem:[%s225 + $0x30] sm:$0xff]
        %v278 = vld [vmem:[%s225 + $0x38] sm:$0xff]
        %v279 = vld [vmem:[%s225 + $0x40] sm:$0xff]
        %v280 = vld [vmem:[%s225 + $0x48] sm:$0xff]
        %v281 = vld [vmem:[%s225 + $0x50] sm:$0xff]
        %v282 = vld [vmem:[%s225 + $0x58] sm:$0xff]
        %v283 = vld [vmem:[%s225 + $0x60] sm:$0xff]
        %v284 = vld [vmem:[%s225 + $0x68] sm:$0xff]
        %v285 = vld [vmem:[%s225 + $0x70] sm:$0xff]
        %v286 = vld [vmem:[%s225 + $0x78] sm:$0xff]
        %v287 = vld [vmem:[%s225 + $0x80] sm:$0xff]
        %v288 = vld [vmem:[%s225 + $0x88] sm:$0xff]
        %v289 = vld [vmem:[%s225 + $0x90] sm:$0xff]
        %v290 = vld [vmem:[%s225 + $0x98] sm:$0xff]
        %v291 = vld [vmem:[%s225 + $0xa0] sm:$0xff]
        %v292 = vld [vmem:[%s225 + $0xa8] sm:$0xff]
        %v293 = vld [vmem:[%s225 + $0xb0] sm:$0xff]
        %v294 = vld [vmem:[%s225 + $0xb8] sm:$0xff]
        %v295 = vld [vmem:[%s225 + $0xc0] sm:$0xff]
        %v296 = vld [vmem:[%s225 + $0xc8] sm:$0xff]
        %v297 = vld [vmem:[%s225 + $0xd0] sm:$0xff]
        %v298 = vld [vmem:[%s225 + $0xd8] sm:$0xff]
        %v299 = vld [vmem:[%s225 + $0xe0] sm:$0xff]
        %v300 = vld [vmem:[%s225 + $0xe8] sm:$0xff]
        %v301 = vld [vmem:[%s225 + $0xf0] sm:$0xff]
        %v302 = vld [vmem:[%s225 + $0xf8] sm:$0xff]
        %v303 = vld [vmem:[%s225 + $0x100] sm:$0xff]
        %v304 = vld [vmem:[%s225 + $0x108] sm:$0xff]
        %v305 = vld [vmem:[%s225 + $0x110] sm:$0xff]
        %v306 = vld [vmem:[%s225 + $0x118] sm:$0xff]
        %v307 = vld [vmem:[%s225 + $0x120] sm:$0xff]
        %v308 = vld [vmem:[%s225 + $0x128] sm:$0xff]
        %v309 = vld [vmem:[%s225 + $0x130] sm:$0xff]
        %v310 = vld [vmem:[%s225 + $0x138] sm:$0xff]
        %v311 = vld [vmem:[%s225 + $0x140] sm:$0xff]
        %v312 = vld [vmem:[%s225 + $0x148] sm:$0xff]
        %v313 = vld [vmem:[%s225 + $0x150] sm:$0xff]
        %v314 = vld [vmem:[%s225 + $0x158] sm:$0xff]
        %v315 = vld [vmem:[%s225 + $0x160] sm:$0xff]
        %v316 = vld [vmem:[%s225 + $0x168] sm:$0xff]
        %v317 = vld [vmem:[%s225 + $0x170] sm:$0xff]
        %v318 = vld [vmem:[%s225 + $0x178] sm:$0xff]
        %v319 = vld [vmem:[%s225 + $0x180] sm:$0xff]
        %v320 = vld [vmem:[%s225 + $0x188] sm:$0xff]
        %v321 = vld [vmem:[%s225 + $0x190] sm:$0xff]
        %v322 = vld [vmem:[%s225 + $0x198] sm:$0xff]
        %v323 = vld [vmem:[%s225 + $0x1a0] sm:$0xff]
        %v324 = vld [vmem:[%s225 + $0x1a8] sm:$0xff]
        %v325 = vld [vmem:[%s225 + $0x1b0] sm:$0xff]
        %v326 = vld [vmem:[%s225 + $0x1b8] sm:$0xff]
        %v327 = vld [vmem:[%s225 + $0x1c0] sm:$0xff]
        %v328 = vld [vmem:[%s225 + $0x1c8] sm:$0xff]
        %v329 = vld [vmem:[%s225 + $0x1d0] sm:$0xff]
        %v330 = vld [vmem:[%s225 + $0x1d8] sm:$0xff]
        %v331 = vld [vmem:[%s225 + $0x1e0] sm:$0xff]
        %v332 = vld [vmem:[%s225 + $0x1e8] sm:$0xff]
        %v333 = vld [vmem:[%s225 + $0x1f0] sm:$0xff]
        %v334 = vld [vmem:[%s225 + $0x1f8] sm:$0xff]
        %v335 = vld [vmem:[%s225 + $0x200] sm:$0xff]
        %v336 = vld [vmem:[%s225 + $0x208] sm:$0xff]
        %v337 = vld [vmem:[%s225 + $0x210] sm:$0xff]
        %v338 = vld [vmem:[%s225 + $0x218] sm:$0xff]
        %v339 = vld [vmem:[%s225 + $0x220] sm:$0xff]
        %v340 = vld [vmem:[%s225 + $0x228] sm:$0xff]
        %v341 = vld [vmem:[%s225 + $0x230] sm:$0xff]
        %v342 = vld [vmem:[%s225 + $0x238] sm:$0xff]
        %v343 = vld [vmem:[%s234] sm:$0xf]
        %v345 = vlaneseq
        %v346 = vshrl.u32 %v345, 7
        %v347 = vsub.s32 0, %v346
        %v348 = vrot.slane %v343, %v347
        %v349 = vlaneseq
        %v350 = vshrl.u32 %v349, 7
        %v351 = vsub.s32 1, %v350
        %v352 = vrot.slane %v343, %v351
        %v353 = vlaneseq
        %v354 = vshrl.u32 %v353, 7
        %v355 = vsub.s32 2, %v354
        %v356 = vrot.slane %v343, %v355
        %v357 = vlaneseq
        %v358 = vshrl.u32 %v357, 7
        %v359 = vsub.s32 3, %v358
        %v360 = vrot.slane %v343, %v359
        %vm365 = vcmask 130048
        %v367 = vsel %vm365, %v268, 0
        %v370 = vsel %vm365, %v270, 0
        %372 = vmatprep.subr.mxu0 %v272
        %373 = vmatpush1.msra.mxu0 %v271
        %374 = vmatprep.subr.mxu0 %v276
        %375 = vmatpush1.msra.mxu0 %v275
        %376 = vmatprep.subr.mxu0 %v280
        %377 = vmatpush1.msra.mxu0 %v279
        %378 = vmatprep.subr.mxu0 %v284
        %379 = vmatpush1.msra.mxu0 %v283
        %380 = vmatprep.subr.mxu0 %v288
        %381 = vmatpush1.msra.mxu0 %v287
        %382 = vmatprep.subr.mxu0 %v292
        %383 = vmatpush1.msra.mxu0 %v291
        %384 = vmatprep.subr.mxu0 %v296
        %385 = vmatpush1.msra.mxu0 %v295
        %386 = vmatprep.subr.mxu0 %v300
        %387 = vmatpush1.msra.mxu0 %v299
        %388 = vmatprep.subr.mxu0 %v304
        %389 = vmatpush1.msra.mxu0 %v303
        %390 = vmatprep.subr.mxu0 %v308
        %391 = vmatpush1.msra.mxu0 %v307
        %392 = vmatprep.subr.mxu0 %v312
        %393 = vmatpush1.msra.mxu0 %v311
        %394 = vmatprep.subr.mxu0 %v316
        %395 = vmatpush1.msra.mxu0 %v315
        %396 = vmatprep.subr.mxu0 %v320
        %397 = vmatpush1.msra.mxu0 %v319
        %398 = vmatprep.subr.mxu0 %v324
        %399 = vmatpush1.msra.mxu0 %v323
        %400 = vmatprep.subr.mxu0 %v328
        %401 = vmatpush1.msra.mxu0 %v327
        %402 = vmatprep.subr.mxu0 %v332
        %403 = vmatpush1.msra.mxu0 %v331
        %404 = vmatprep.subr.mxu0 %v336
        %405 = vmatpush1.msra.mxu0 %v335
        %406 = vmatprep.subr.mxu0 %v340
        %407 = vmatpush1.msra.mxu0 %v339
        %408 = vmatprep.subr.mxu0 0.0
        %409 = vmatpush1.msra.mxu0 0.0
        %410 = vmatprep.subr.mxu0 0.0
        %411 = vmatpush1.msra.mxu0 0.0
        %412 = vmatprep.subr.mxu0 0.0
        %413 = vmatpush1.msra.mxu0 0.0
        %414 = vmatprep.subr.mxu0 0.0
        %415 = vmatpush1.msra.mxu0 0.0
        %416 = vmatprep.subr.mxu0 0.0
        %417 = vmatpush1.msra.mxu0 0.0
        %418 = vmatprep.subr.mxu0 0.0
        %419 = vmatpush1.msra.mxu0 0.0
        %420 = vmatprep.subr.mxu0 0.0
        %421 = vmatpush1.msra.mxu0 0.0
        %422 = vmatprep.subr.mxu0 0.0
        %423 = vmatpush1.msra.mxu0 0.0
        %424 = vmatprep.subr.mxu0 0.0
        %425 = vmatpush1.msra.mxu0 0.0
        %426 = vmatprep.subr.mxu0 0.0
        %427 = vmatpush1.msra.mxu0 0.0
        %428 = vmatprep.subr.mxu0 0.0
        %429 = vmatpush1.msra.mxu0 0.0
        %430 = vmatprep.subr.mxu0 0.0
        %431 = vmatpush1.msra.mxu0 0.0
        %432 = vmatprep.subr.mxu0 0.0
        %433 = vmatpush1.msra.mxu0 0.0
        %434 = vmatprep.subr.mxu0 0.0
        %435 = vmatpush1.msra.mxu0 0.0
        %436 = vmatprep.mubr.f32.mxu0 %v367
        %437 = vmatmul.mubr.f32.gmra.mrb[0].mxu0 %v267
        %v438 = vpop.f32.mrb[0].mxu0
        %v439 = vadd.f32 %v348, %v438
        %v440 = vpop.f32.mrb[0].mxu0
        %v441 = vadd.f32 %v352, %v440
        %442 = vmatprep.mubr.f32.mxu0 %v370
        %443 = vmatmul.mubr.f32.gmra.mrb[0].mxu0 %v269
        %v444 = vpop.f32.mrb[0].mxu0
        %v445 = vadd.f32 %v348, %v444
        %v446 = vpop.f32.mrb[0].mxu0
        %v447 = vadd.f32 %v352, %v446
        %448 = vdwg.mxu0
        %449 = vmatprep.subr.mxu0 %v274
        %450 = vmatpush1.msra.mxu0 %v273
        %451 = vmatprep.subr.mxu0 %v278
        %452 = vmatpush1.msra.mxu0 %v277
        %453 = vmatprep.subr.mxu0 %v282
        %454 = vmatpush1.msra.mxu0 %v281
        %455 = vmatprep.subr.mxu0 %v286
        %456 = vmatpush1.msra.mxu0 %v285
        %457 = vmatprep.subr.mxu0 %v290
        %458 = vmatpush1.msra.mxu0 %v289
        %459 = vmatprep.subr.mxu0 %v294
        %460 = vmatpush1.msra.mxu0 %v293
        %461 = vmatprep.subr.mxu0 %v298
        %462 = vmatpush1.msra.mxu0 %v297
        %463 = vmatprep.subr.mxu0 %v302
        %464 = vmatpush1.msra.mxu0 %v301
        %465 = vmatprep.subr.mxu0 %v306
        %466 = vmatpush1.msra.mxu0 %v305
        %467 = vmatprep.subr.mxu0 %v310
        %468 = vmatpush1.msra.mxu0 %v309
        %469 = vmatprep.subr.mxu0 %v314
        %470 = vmatpush1.msra.mxu0 %v313
        %471 = vmatprep.subr.mxu0 %v318
        %472 = vmatpush1.msra.mxu0 %v317
        %473 = vmatprep.subr.mxu0 %v322
        %474 = vmatpush1.msra.mxu0 %v321
        %475 = vmatprep.subr.mxu0 %v326
        %476 = vmatpush1.msra.mxu0 %v325
        %477 = vmatprep.subr.mxu0 %v330
        %478 = vmatpush1.msra.mxu0 %v329
        %479 = vmatprep.subr.mxu0 %v334
        %480 = vmatpush1.msra.mxu0 %v333
        %481 = vmatprep.subr.mxu0 %v338
        %482 = vmatpush1.msra.mxu0 %v337
        %483 = vmatprep.subr.mxu0 %v342
        %484 = vmatpush1.msra.mxu0 %v341
        %485 = vmatprep.subr.mxu0 0.0
        %486 = vmatpush1.msra.mxu0 0.0
        %487 = vmatprep.subr.mxu0 0.0
        %488 = vmatpush1.msra.mxu0 0.0
        %489 = vmatprep.subr.mxu0 0.0
        %490 = vmatpush1.msra.mxu0 0.0
        %491 = vmatprep.subr.mxu0 0.0
        %492 = vmatpush1.msra.mxu0 0.0
        %493 = vmatprep.subr.mxu0 0.0
        %494 = vmatpush1.msra.mxu0 0.0
        %495 = vmatprep.subr.mxu0 0.0
        %496 = vmatpush1.msra.mxu0 0.0
        %497 = vmatprep.subr.mxu0 0.0
        %498 = vmatpush1.msra.mxu0 0.0
        %499 = vmatprep.subr.mxu0 0.0
        %500 = vmatpush1.msra.mxu0 0.0
        %501 = vmatprep.subr.mxu0 0.0
        %502 = vmatpush1.msra.mxu0 0.0
        %503 = vmatprep.subr.mxu0 0.0
        %504 = vmatpush1.msra.mxu0 0.0
        %505 = vmatprep.subr.mxu0 0.0
        %506 = vmatpush1.msra.mxu0 0.0
        %507 = vmatprep.subr.mxu0 0.0
        %508 = vmatpush1.msra.mxu0 0.0
        %509 = vmatprep.subr.mxu0 0.0
        %510 = vmatpush1.msra.mxu0 0.0
        %511 = vmatprep.subr.mxu0 0.0
        %512 = vmatpush1.msra.mxu0 0.0
        %513 = vmatprep.mubr.f32.mxu0 %v367
        %514 = vmatmul.mubr.f32.gmra.mrb[0].mxu0 %v267
        %v515 = vpop.f32.mrb[0].mxu0
        %v516 = vadd.f32 %v356, %v515
        %v517 = vpop.f32.mrb[0].mxu0
        %v518 = vadd.f32 %v360, %v517
        %519 = vmatprep.mubr.f32.mxu0 %v370
        %520 = vmatmul.mubr.f32.gmra.mrb[0].mxu0 %v269
        %v521 = vpop.f32.mrb[0].mxu0
        %v522 = vadd.f32 %v356, %v521
        %v523 = vpop.f32.mrb[0].mxu0
        %v524 = vadd.f32 %v360, %v523
        %525 = vdwg.mxu0
        %526 = vst [vmem:[%s261] sm:$0xff] %v439
        %527 = vst [vmem:[%s261 + $0x8] sm:$0xff] %v441
        %528 = vst [vmem:[%s261 + $0x10] sm:$0xff] %v516
        %529 = vst [vmem:[%s261 + $0x18] sm:$0xff] %v518
        %530 = vst [vmem:[%s261 + $0x20] sm:$0xff] %v445
        %531 = vst [vmem:[%s261 + $0x28] sm:$0xff] %v447
        %532 = vst [vmem:[%s261 + $0x30] sm:$0xff] %v522
        %533 = vst [vmem:[%s261 + $0x38] sm:$0xff] %v524
        %s534 = sand.u32 %s121, 1
        %s535 = scalar_lea.sflag [#allocation4], %s534
        %s536 = sand.u32 %s121, 1
        %s537 = smul.addr %s536, 64
        %s538 = scalar_lea.vmem [#allocation8], %s537
        // Predicated region
        $region45: #{lstm_forward.6} parent=31 // pred_check
          %p539 = pneg %p131
        $region46: #{lstm_forward.6} parent=31 // pred_check_branch
          %541 = sbr.rel (%p539) target = $region48
        $region47: #{lstm_forward.6} parent=31 // pred_region
          %s542 = smul.u32 2, %s25
          %s543 = smul.u32 4, %s26
          %s545 = ssub.s32 1024, 1024
          %546 = vsyncadd %s535, %s545
          %s547 = smul.addr %s542, 8
          %s548 = sadd.s32 %s543, %s547
          %s549 = smul.addr %s548, 128
          %s550 = scalar_lea.hbm %s3, %s549
          %s551 = sshll.u32 %s538, 4
          %s552 = int_to_ptr.vmem [resolvable:$true] %s551
          %557 = dma.vmem_to_hbm [thread:$0]  %s552, 1024, %s550, %s535, 512, 1024, 32
        $region48: #{lstm_forward.6} parent=31 // pred_fallthru
          _
      $region32: #{lstm_forward.6} parent=5 // pred_fallthru
        _
      %p558 = scmp.le.s32.totalorder 2, %s16
      // Predicated region
      $region49: #{lstm_forward.6} parent=5 // pred_check
        %p559 = pneg %p558
      $region50: #{lstm_forward.6} parent=5 // pred_check_branch
        %561 = sbr.rel (%p559) target = $region52
      $region51: #{lstm_forward.6} parent=5 // pred_region
        %s562 = ssub.s32 %s16, 2
        // Predicated region
        $region53: #{lstm_forward.6} parent=51 // pred_check
          %p563 = pneg %p137
        $region54: #{lstm_forward.6} parent=51 // pred_check_branch
          %565 = sbr.rel (%p563) target = $region56
        $region55: #{lstm_forward.6} parent=51 // pred_region
          %s566 = sand.u32 %s122, 1
          %s567 = scalar_lea.sflag [#allocation4], %s566
          %s568 = sand.u32 %s122, 1
          %s569 = smul.addr %s568, 64
          %s570 = scalar_lea.vmem [#allocation8], %s569
          %571 = dma.done %s567, 1024
        $region56: #{lstm_forward.6} parent=51 // pred_fallthru
          _
      $region52: #{lstm_forward.6} parent=5 // pred_fallthru
        _
    $region6: #{lstm_forward.6} parent=1 // loop_footer
      %s20 = sadd.s32 1, %s16
    $region7: #{lstm_forward.6} parent=1 // loop_footer_branch
      %15 = sbr.rel target = $region3
    $region8: #{lstm_forward.6} parent=1 // loop_exit
      _
    %572 = vsyncpa [#allocation3], 1
    %s573 = scalar_lea.sflag [#allocation3], 1
    %574 = vsyncpa %s573, 1
    %575 = vsyncpa [#allocation6], 1
    %s576 = scalar_lea.sflag [#allocation6], 1
    %577 = vsyncpa %s576, 1
    %578 = vsyncpa [#allocation4], 1
    %s579 = scalar_lea.sflag [#allocation4], 1
    %580 = vsyncpa %s579, 1

// kernel: lstm_forward.8
$region0: #{lstm_forward.8}
  #allocation0 [shape = 'u32[]', space=smem, size = 0x4, offset = 0x4, fixed_abs, tag = 'smem constant byte address 0x4 - core index']
  #allocation1 [shape = 'u32[144,128]{1,0:T(1,128)}', space=vmem, size = 0x12000, scoped, tag = 'internal scratch']
  %s0 = inlined_call_operand.hbm [shape: f32[16,256], index: 0, kind: input, shape index: {}]
  %s1 = inlined_call_operand.hbm [shape: f32[256,1024], index: 1, kind: input, shape index: {}]
  %s2 = inlined_call_operand.hbm [shape: f32[1,1024], index: 2, kind: input, shape index: {}]
  %s3 = inlined_call_operand.hbm [shape: f32[16,1024], index: 3, kind: output, shape index: {}]
  %s4 = sld [smem:[#allocation0]]
  $region57: #{lstm_forward.8} parent=0
    _
  %s6 = ssub.s32 1, %s4
  %s7 = scalar_select 0, %s6, %s4
  $region1: #{lstm_forward.8} parent=0
    #allocation2 [shape = 'u8[16384]{0}', space=vmem, size = 0x4000, scoped, tag = 'input window, operand 0, single buffered']
    #allocation3 [shape = 's32[2]{0}', space=sflag, size = 0x8, scoped, tag = 'scoped memory for lstm_forward.8']
    #allocation4 [shape = 's32[2]{0}', space=sflag, size = 0x8, scoped, tag = 'scoped memory for lstm_forward.8']
    #allocation5 [shape = 'u8[1048576]{0}', space=vmem, size = 0x100000, scoped, tag = 'input window, operand 1']
    #allocation6 [shape = 's32[2]{0}', space=sflag, size = 0x8, scoped, tag = 'scoped memory for lstm_forward.8']
    #allocation7 [shape = 'u8[4096]{0}', space=vmem, size = 0x1000, scoped, tag = 'input window, operand 2']
    #allocation8 [shape = 'u8[65536]{0}', space=vmem, size = 0x10000, scoped, tag = 'output window, operand 0']
    %8 = vsyncpa [#allocation3], 0
    %9 = vsyncpa [#allocation6], 0
    %s10 = scalar_lea.sflag [#allocation6], 1
    %11 = vsyncpa %s10, 0
    %12 = vsyncpa [#allocation4], 0
    %s13 = scalar_lea.sflag [#allocation4], 1
    %14 = vsyncpa %s13, 0
    loop: start=0, step=1, limit=4
    $region2: #{lstm_forward.8} parent=1 // loop_pre_header
      _
    $region3: #{lstm_forward.8} parent=1 // loop_header
      %s16 = sphi 0, %s20
      %p17 = scmp.ge.s32.totalorder %s16, 4
      %s23 = sphi 0, %s35
      %s24 = sphi 0, %s31
      %s25 = sphi 0, %s23
      %s26 = sphi 0, %s24
      %s27 = sphi 0, %s25
      %s28 = sphi 0, %s26
      %s38 = sphi 0, %s40
      %s41 = sphi 0, %s38
      %s42 = sphi 0, %s41
      %s58 = sphi 0, %s42
      %s64 = sphi 0, %s66
      %s67 = sphi 0, %s64
      %s68 = sphi 0, %s67
      %s84 = sphi 0, %s68
      %s90 = sphi 0, %s92
      %s93 = sphi 0, %s90
      %s94 = sphi 0, %s93
      %s110 = sphi 0, %s94
      %s118 = sphi 0, %s120
      %s121 = sphi 0, %s118
      %s122 = sphi 0, %s121
      %s138 = sphi 0, %s122
    $region4: #{lstm_forward.8} parent=1 // loop_header_branch
      %19 = sbr.rel (%p17) target = $region8
    $region5: #{lstm_forward.8} parent=1 // loop_body
      %s21 = ssub.s32 %s16, 1
      %s22 = ssub.s32 %s16, 2
      %s29 = sadd.s32 1, %s24
      %p30 = scmp.ge.s32.totalorder %s29, 2
      %s31 = scalar_select %p30, 0, %s29
      %s32 = sadd.s32 1, %s23
      %s33 = scalar_select %p30, %s32, %s23
      %p34 = scmp.ge.s32.totalorder %s33, 1
      %s35 = scalar_select %p34, 0, %s33
      %s36 = ssub.s32 %s23, %s35
      %p37 = scmp.eq.s32.totalorder %s36, 0
      %s39 = sadd.s32 %s38, 1
      %s40 = scalar_select %p37, %s38, %s39
      %p43 = pneg %p37
      %p44 = scmp.eq.s32.totalorder %s16, 1
      %p45 = por %p43, %p44
      %p46 = scmp.ne.s32.totalorder %s38, %s41
      %p47 = scmp.eq.s32.totalorder %s16, 0
      %p48 = por %p46, %p47
      %p49 = scmp.ne.s32.totalorder %s38, %s41
      %p50 = scmp.eq.s32.totalorder %s21, 1
      %p51 = por %p49, %p50
      %p52 = scmp.ne.s32.totalorder %s41, %s42
      %p53 = scmp.eq.s32.totalorder %s21, 0
      %p54 = por %p52, %p53
      %p55 = scmp.ne.s32.totalorder %s41, %s42
      %p56 = scmp.eq.s32.totalorder %s22, 1
      %p57 = por %p55, %p56
      %p59 = scmp.ne.s32.totalorder %s42, %s58
      %p60 = scmp.eq.s32.totalorder %s22, 0
      %p61 = por %p59, %p60
      %s62 = ssub.s32 %s24, %s31
      %p63 = scmp.eq.s32.totalorder %s62, 0
      %s65 = sadd.s32 %s64, 1
      %s66 = scalar_select %p63, %s64, %s65
      %p69 = pneg %p63
      %p70 = scmp.eq.s32.totalorder %s16, 1
      %p71 = por %p69, %p70
      %p72 = scmp.ne.s32.totalorder %s64, %s67
      %p73 = scmp.eq.s32.totalorder %s16, 0
      %p74 = por %p72, %p73
      %p75 = scmp.ne.s32.totalorder %s64, %s67
      %p76 = scmp.eq.s32.totalorder %s21, 1
      %p77 = por %p75, %p76
      %p78 = scmp.ne.s32.totalorder %s67, %s68
      %p79 = scmp.eq.s32.totalorder %s21, 0
      %p80 = por %p78, %p79
      %p81 = scmp.ne.s32.totalorder %s67, %s68
      %p82 = scmp.eq.s32.totalorder %s22, 1
      %p83 = por %p81, %p82
      %p85 = scmp.ne.s32.totalorder %s68, %s84
      %p86 = scmp.eq.s32.totalorder %s22, 0
      %p87 = por %p85, %p86
      %s88 = ssub.s32 %s24, %s31
      %p89 = scmp.eq.s32.totalorder %s88, 0
      %s91 = sadd.s32 %s90, 1
      %s92 = scalar_select %p89, %s90, %s91
      %p95 = pneg %p89
      %p96 = scmp.eq.s32.totalorder %s16, 1
      %p97 = por %p95, %p96
      %p98 = scmp.ne.s32.totalorder %s90, %s93
      %p99 = scmp.eq.s32.totalorder %s16, 0
      %p100 = por %p98, %p99
      %p101 = scmp.ne.s32.totalorder %s90, %s93
      %p102 = scmp.eq.s32.totalorder %s21, 1
      %p103 = por %p101, %p102
      %p104 = scmp.ne.s32.totalorder %s93, %s94
      %p105 = scmp.eq.s32.totalorder %s21, 0
      %p106 = por %p104, %p105
      %p107 = scmp.ne.s32.totalorder %s93, %s94
      %p108 = scmp.eq.s32.totalorder %s22, 1
      %p109 = por %p107, %p108
      %p111 = scmp.ne.s32.totalorder %s94, %s110
      %p112 = scmp.eq.s32.totalorder %s22, 0
      %p113 = por %p111, %p112
      %s114 = ssub.s32 %s23, %s35
      %s115 = ssub.s32 %s24, %s31
      %s116 = sor.u32 %s114, %s115
      %p117 = scmp.eq.s32.totalorder %s116, 0
      %s119 = sadd.s32 %s118, 1
      %s120 = scalar_select %p117, %s118, %s119
      %p123 = pneg %p117
      %p124 = scmp.eq.s32.totalorder %s16, 1
      %p125 = por %p123, %p124
      %p126 = scmp.ne.s32.totalorder %s118, %s121
      %p127 = scmp.eq.s32.totalorder %s16, 0
      %p128 = por %p126, %p127
      %p129 = scmp.ne.s32.totalorder %s118, %s121
      %p130 = scmp.eq.s32.totalorder %s21, 1
      %p131 = por %p129, %p130
      %p132 = scmp.ne.s32.totalorder %s121, %s122
      %p133 = scmp.eq.s32.totalorder %s21, 0
      %p134 = por %p132, %p133
      %p135 = scmp.ne.s32.totalorder %s121, %s122
      %p136 = scmp.eq.s32.totalorder %s22, 1
      %p137 = por %p135, %p136
      %p139 = scmp.ne.s32.totalorder %s122, %s138
      %p140 = scmp.eq.s32.totalorder %s22, 0
      %p141 = por %p139, %p140
      %p142 = scmp.le.s32.totalorder 1, %s16
      %p143 = scmp.lt.s32.totalorder %s16, 3
      %p144 = pnand %p142, %p143
      %p145 = pneg %p144
      // Predicated region
      $region9: #{lstm_forward.8} parent=5 // pred_check
        _
      $region10: #{lstm_forward.8} parent=5 // pred_check_branch
        %147 = sbr.rel (%p144) target = $region12
      $region11: #{lstm_forward.8} parent=5 // pred_region
        %s148 = ssub.s32 %s16, 1
        // Predicated region
        $region13: #{lstm_forward.8} parent=11 // pred_check
          %p149 = pneg %p54
        $region14: #{lstm_forward.8} parent=11 // pred_check_branch
          %151 = sbr.rel (%p149) target = $region16
        $region15: #{lstm_forward.8} parent=11 // pred_region
          %s152 = smul.u32 2, %s25
          %s154 = ssub.s32 512, 512
          %155 = vsyncadd [#allocation3], %s154
          %s156 = smul.addr %s152, 2
          %s157 = smul.addr %s156, 128
          %s158 = scalar_lea.hbm %s0, %s157
          %s159 = sshll.u32 [#allocation2], 4
          %s160 = int_to_ptr.vmem [resolvable:$true] %s159
          %165 = dma.hbm_to_vmem [thread:$0]  %s158, 512, %s160, [#allocation3], 256, 256, 16
        $region16: #{lstm_forward.8} parent=11 // pred_fallthru
          _
      $region12: #{lstm_forward.8} parent=5 // pred_fallthru
        _
      %p166 = scmp.lt.s32.totalorder %s16, 2
      // Predicated region
      $region17: #{lstm_forward.8} parent=5 // pred_check
        %p167 = pneg %p166
      $region18: #{lstm_forward.8} parent=5 // pred_check_branch
        %169 = sbr.rel (%p167) target = $region20
      $region19: #{lstm_forward.8} parent=5 // pred_region
        // Predicated region
        $region21: #{lstm_forward.8} parent=19 // pred_check
          %p170 = pneg %p74
        $region22: #{lstm_forward.8} parent=19 // pred_check_branch
          %172 = sbr.rel (%p170) target = $region24
        $region23: #{lstm_forward.8} parent=19 // pred_region
          %s173 = sand.u32 %s16, 1
          %s174 = scalar_lea.sflag [#allocation6], %s173
          %s175 = sand.u32 %s64, 1
          %s176 = smul.addr %s175, 1024
          %s177 = scalar_lea.vmem [#allocation5], %s176
          %s178 = smul.u32 4, %s24
          %s180 = ssub.s32 16384, 16384
          %181 = vsyncadd %s174, %s180
          %s182 = smul.addr %s178, 128
          %s183 = scalar_lea.hbm %s1, %s182
          %s184 = sshll.u32 %s177, 4
          %s185 = int_to_ptr.vmem [resolvable:$true] %s184
          %190 = dma.hbm_to_vmem [thread:$0]  %s183, 16384, %s185, %s174, 1024, 512, 32
        $region24: #{lstm_forward.8} parent=19 // pred_fallthru
          _
        // Predicated region
        $region25: #{lstm_forward.8} parent=19 // pred_check
          %p191 = pneg %p100
        $region26: #{lstm_forward.8} parent=19 // pred_check_branch
          %193 = sbr.rel (%p191) target = $region28
        $region27: #{lstm_forward.8} parent=19 // pred_region
          %s194 = sand.u32 %s16, 1
          %s195 = scalar_lea.sflag [#allocation6], %s194
          %s196 = sand.u32 %s90, 1
          %s197 = smul.addr %s196, 4
          %s198 = scalar_lea.vmem [#allocation7], %s197
          %s199 = smul.u32 4, %s24
          %s201 = ssub.s32 64, 64
          %202 = vsyncadd %s195, %s201
          %s203 = smul.addr %s199, 16
          %s204 = scalar_lea.hbm %s2, %s203
          %s206 = sshll.u32 %s198, 4
          %s207 = int_to_ptr.vmem [resolvable:$true] %s206
          %209 = dma.hbm_to_vmem [thread:$0]  %s204, 64, %s207, %s195
        $region28: #{lstm_forward.8} parent=19 // pred_fallthru
          _
      $region20: #{lstm_forward.8} parent=5 // pred_fallthru
        _
      %p210 = scmp.le.s32.totalorder 1, %s16
      %p211 = scmp.lt.s32.totalorder %s16, 3
      %p212 = pnand %p210, %p211
      %p213 = pneg %p212
      // Predicated region
      $region29: #{lstm_forward.8} parent=5 // pred_check
        _
      $region30: #{lstm_forward.8} parent=5 // pred_check_branch
        %215 = sbr.rel (%p212) target = $region32
      $region31: #{lstm_forward.8} parent=5 // pred_region
        %s216 = ssub.s32 %s16, 1
        // Predicated region
        $region33: #{lstm_forward.8} parent=31 // pred_check
          %p217 = pneg %p54
        $region34: #{lstm_forward.8} parent=31 // pred_check_branch
          %219 = sbr.rel (%p217) target = $region36
        $region35: #{lstm_forward.8} parent=31 // pred_region
          %220 = dma.done [#allocation3], 512
        $region36: #{lstm_forward.8} parent=31 // pred_fallthru
          _
        %s221 = sand.u32 %s21, 1
        %s222 = scalar_lea.sflag [#allocation6], %s221
        %s223 = sand.u32 %s67, 1
        %s224 = smul.addr %s223, 1024
        %s225 = scalar_lea.vmem [#allocation5], %s224
        // Predicated region
        $region37: #{lstm_forward.8} parent=31 // pred_check
          %p226 = pneg %p80
        $region38: #{lstm_forward.8} parent=31 // pred_check_branch
          %228 = sbr.rel (%p226) target = $region40
        $region39: #{lstm_forward.8} parent=31 // pred_region
          %229 = dma.done %s222, 16384
        $region40: #{lstm_forward.8} parent=31 // pred_fallthru
          _
        %s230 = sand.u32 %s21, 1
        %s231 = scalar_lea.sflag [#allocation6], %s230
        %s232 = sand.u32 %s93, 1
        %s233 = smul.addr %s232, 4
        %s234 = scalar_lea.vmem [#allocation7], %s233
        // Predicated region
        $region41: #{lstm_forward.8} parent=31 // pred_check
          %p235 = pneg %p106
        $region42: #{lstm_forward.8} parent=31 // pred_check_branch
          %237 = sbr.rel (%p235) target = $region44
        $region43: #{lstm_forward.8} parent=31 // pred_region
          %238 = dma.done %s231, 64
        $region44: #{lstm_forward.8} parent=31 // pred_fallthru
          _
        %p239 = pneg %p54
        %p240 = pneg %p51
        %s241 = sand.u32 %s21, 1
        %s242 = scalar_lea.sflag [#allocation6], %s241
        %s243 = sand.u32 %s67, 1
        %s244 = smul.addr %s243, 1024
        %s245 = scalar_lea.vmem [#allocation5], %s244
        %p246 = pneg %p80
        %p247 = pneg %p77
        %s248 = sand.u32 %s21, 1
        %s249 = scalar_lea.sflag [#allocation6], %s248
        %s250 = sand.u32 %s93, 1
        %s251 = smul.addr %s250, 4
        %s252 = scalar_lea.vmem [#allocation7], %s251
        %p253 = pneg %p106
        %p254 = pneg %p103
        %p255 = pneg %p134
        %p256 = pneg %p131
        %s257 = sand.u32 %s121, 1
        %s258 = scalar_lea.sflag [#allocation4], %s257
        %s259 = sand.u32 %s121, 1
        %s260 = smul.addr %s259, 64
        %s261 = scalar_lea.vmem [#allocation8], %s260
        %s262 = smul.u32 2, %s25
        %s263 = smul.u32 4, %s26
        %s264 = smul.u32 4, %s26
        %s265 = smul.u32 2, %s25
        %s266 = smul.u32 4, %s26
        %v267 = vld [vmem:[#allocation2] sm:$0xff]
        %v268 = vld [vmem:[#allocation2 + $0x8] sm:$0xff]
        %v269 = vld [vmem:[#allocation2 + $0x10] sm:$0xff]
        %v270 = vld [vmem:[#allocation2 + $0x18] sm:$0xff]
        %v271 = vld [vmem:[%s225] sm:$0xff]
        %v272 = vld [vmem:[%s225 + $0x8] sm:$0xff]
        %v273 = vld [vmem:[%s225 + $0x10] sm:$0xff]
        %v274 = vld [vmem:[%s225 + $0x18] sm:$0xff]
        %v275 = vld [vmem:[%s225 + $0x20] sm:$0xff]
        %v276 = vld [vmem:[%s225 + $0x28] sm:$0xff]
        %v277 = vld [vmem:[%s225 + $0x30] sm:$0xff]
        %v278 = vld [vmem:[%s225 + $0x38] sm:$0xff]
        %v279 = vld [vmem:[%s225 + $0x40] sm:$0xff]
        %v280 = vld [vmem:[%s225 + $0x48] sm:$0xff]
        %v281 = vld [vmem:[%s225 + $0x50] sm:$0xff]
        %v282 = vld [vmem:[%s225 + $0x58] sm:$0xff]
        %v283 = vld [vmem:[%s225 + $0x60] sm:$0xff]
        %v284 = vld [vmem:[%s225 + $0x68] sm:$0xff]
        %v285 = vld [vmem:[%s225 + $0x70] sm:$0xff]
        %v286 = vld [vmem:[%s225 + $0x78] sm:$0xff]
        %v287 = vld [vmem:[%s225 + $0x80] sm:$0xff]
        %v288 = vld [vmem:[%s225 + $0x88] sm:$0xff]
        %v289 = vld [vmem:[%s225 + $0x90] sm:$0xff]
        %v290 = vld [vmem:[%s225 + $0x98] sm:$0xff]
        %v291 = vld [vmem:[%s225 + $0xa0] sm:$0xff]
        %v292 = vld [vmem:[%s225 + $0xa8] sm:$0xff]
        %v293 = vld [vmem:[%s225 + $0xb0] sm:$0xff]
        %v294 = vld [vmem:[%s225 + $0xb8] sm:$0xff]
        %v295 = vld [vmem:[%s225 + $0xc0] sm:$0xff]
        %v296 = vld [vmem:[%s225 + $0xc8] sm:$0xff]
        %v297 = vld [vmem:[%s225 + $0xd0] sm:$0xff]
        %v298 = vld [vmem:[%s225 + $0xd8] sm:$0xff]
        %v299 = vld [vmem:[%s225 + $0xe0] sm:$0xff]
        %v300 = vld [vmem:[%s225 + $0xe8] sm:$0xff]
        %v301 = vld [vmem:[%s225 + $0xf0] sm:$0xff]
        %v302 = vld [vmem:[%s225 + $0xf8] sm:$0xff]
        %v303 = vld [vmem:[%s225 + $0x100] sm:$0xff]
        %v304 = vld [vmem:[%s225 + $0x108] sm:$0xff]
        %v305 = vld [vmem:[%s225 + $0x110] sm:$0xff]
        %v306 = vld [vmem:[%s225 + $0x118] sm:$0xff]
        %v307 = vld [vmem:[%s225 + $0x120] sm:$0xff]
        %v308 = vld [vmem:[%s225 + $0x128] sm:$0xff]
        %v309 = vld [vmem:[%s225 + $0x130] sm:$0xff]
        %v310 = vld [vmem:[%s225 + $0x138] sm:$0xff]
        %v311 = vld [vmem:[%s225 + $0x140] sm:$0xff]
        %v312 = vld [vmem:[%s225 + $0x148] sm:$0xff]
        %v313 = vld [vmem:[%s225 + $0x150] sm:$0xff]
        %v314 = vld [vmem:[%s225 + $0x158] sm:$0xff]
        %v315 = vld [vmem:[%s225 + $0x160] sm:$0xff]
        %v316 = vld [vmem:[%s225 + $0x168] sm:$0xff]
        %v317 = vld [vmem:[%s225 + $0x170] sm:$0xff]
        %v318 = vld [vmem:[%s225 + $0x178] sm:$0xff]
        %v319 = vld [vmem:[%s225 + $0x180] sm:$0xff]
        %v320 = vld [vmem:[%s225 + $0x188] sm:$0xff]
        %v321 = vld [vmem:[%s225 + $0x190] sm:$0xff]
        %v322 = vld [vmem:[%s225 + $0x198] sm:$0xff]
        %v323 = vld [vmem:[%s225 + $0x1a0] sm:$0xff]
        %v324 = vld [vmem:[%s225 + $0x1a8] sm:$0xff]
        %v325 = vld [vmem:[%s225 + $0x1b0] sm:$0xff]
        %v326 = vld [vmem:[%s225 + $0x1b8] sm:$0xff]
        %v327 = vld [vmem:[%s225 + $0x1c0] sm:$0xff]
        %v328 = vld [vmem:[%s225 + $0x1c8] sm:$0xff]
        %v329 = vld [vmem:[%s225 + $0x1d0] sm:$0xff]
        %v330 = vld [vmem:[%s225 + $0x1d8] sm:$0xff]
        %v331 = vld [vmem:[%s225 + $0x1e0] sm:$0xff]
        %v332 = vld [vmem:[%s225 + $0x1e8] sm:$0xff]
        %v333 = vld [vmem:[%s225 + $0x1f0] sm:$0xff]
        %v334 = vld [vmem:[%s225 + $0x1f8] sm:$0xff]
        %v335 = vld [vmem:[%s225 + $0x200] sm:$0xff]
        %v336 = vld [vmem:[%s225 + $0x208] sm:$0xff]
        %v337 = vld [vmem:[%s225 + $0x210] sm:$0xff]
        %v338 = vld [vmem:[%s225 + $0x218] sm:$0xff]
        %v339 = vld [vmem:[%s225 + $0x220] sm:$0xff]
        %v340 = vld [vmem:[%s225 + $0x228] sm:$0xff]
        %v341 = vld [vmem:[%s225 + $0x230] sm:$0xff]
        %v342 = vld [vmem:[%s225 + $0x238] sm:$0xff]
        %v343 = vld [vmem:[%s225 + $0x240] sm:$0xff]
        %v344 = vld [vmem:[%s225 + $0x248] sm:$0xff]
        %v345 = vld [vmem:[%s225 + $0x250] sm:$0xff]
        %v346 = vld [vmem:[%s225 + $0x258] sm:$0xff]
        %v347 = vld [vmem:[%s225 + $0x260] sm:$0xff]
        %v348 = vld [vmem:[%s225 + $0x268] sm:$0xff]
        %v349 = vld [vmem:[%s225 + $0x270] sm:$0xff]
        %v350 = vld [vmem:[%s225 + $0x278] sm:$0xff]
        %v351 = vld [vmem:[%s225 + $0x280] sm:$0xff]
        %v352 = vld [vmem:[%s225 + $0x288] sm:$0xff]
        %v353 = vld [vmem:[%s225 + $0x290] sm:$0xff]
        %v354 = vld [vmem:[%s225 + $0x298] sm:$0xff]
        %v355 = vld [vmem:[%s225 + $0x2a0] sm:$0xff]
        %v356 = vld [vmem:[%s225 + $0x2a8] sm:$0xff]
        %v357 = vld [vmem:[%s225 + $0x2b0] sm:$0xff]
        %v358 = vld [vmem:[%s225 + $0x2b8] sm:$0xff]
        %v359 = vld [vmem:[%s225 + $0x2c0] sm:$0xff]
        %v360 = vld [vmem:[%s225 + $0x2c8] sm:$0xff]
        %v361 = vld [vmem:[%s225 + $0x2d0] sm:$0xff]
        %v362 = vld [vmem:[%s225 + $0x2d8] sm:$0xff]
        %v363 = vld [vmem:[%s225 + $0x2e0] sm:$0xff]
        %v364 = vld [vmem:[%s225 + $0x2e8] sm:$0xff]
        %v365 = vld [vmem:[%s225 + $0x2f0] sm:$0xff]
        %v366 = vld [vmem:[%s225 + $0x2f8] sm:$0xff]
        %v367 = vld [vmem:[%s225 + $0x300] sm:$0xff]
        %v368 = vld [vmem:[%s225 + $0x308] sm:$0xff]
        %v369 = vld [vmem:[%s225 + $0x310] sm:$0xff]
        %v370 = vld [vmem:[%s225 + $0x318] sm:$0xff]
        %v371 = vld [vmem:[%s225 + $0x320] sm:$0xff]
        %v372 = vld [vmem:[%s225 + $0x328] sm:$0xff]
        %v373 = vld [vmem:[%s225 + $0x330] sm:$0xff]
        %v374 = vld [vmem:[%s225 + $0x338] sm:$0xff]
        %v375 = vld [vmem:[%s225 + $0x340] sm:$0xff]
        %v376 = vld [vmem:[%s225 + $0x348] sm:$0xff]
        %v377 = vld [vmem:[%s225 + $0x350] sm:$0xff]
        %v378 = vld [vmem:[%s225 + $0x358] sm:$0xff]
        %v379 = vld [vmem:[%s225 + $0x360] sm:$0xff]
        %v380 = vld [vmem:[%s225 + $0x368] sm:$0xff]
        %v381 = vld [vmem:[%s225 + $0x370] sm:$0xff]
        %v382 = vld [vmem:[%s225 + $0x378] sm:$0xff]
        %v383 = vld [vmem:[%s225 + $0x380] sm:$0xff]
        %v384 = vld [vmem:[%s225 + $0x388] sm:$0xff]
        %v385 = vld [vmem:[%s225 + $0x390] sm:$0xff]
        %v386 = vld [vmem:[%s225 + $0x398] sm:$0xff]
        %v387 = vld [vmem:[%s225 + $0x3a0] sm:$0xff]
        %v388 = vld [vmem:[%s225 + $0x3a8] sm:$0xff]
        %v389 = vld [vmem:[%s225 + $0x3b0] sm:$0xff]
        %v390 = vld [vmem:[%s225 + $0x3b8] sm:$0xff]
        %v391 = vld [vmem:[%s225 + $0x3c0] sm:$0xff]
        %v392 = vld [vmem:[%s225 + $0x3c8] sm:$0xff]
        %v393 = vld [vmem:[%s225 + $0x3d0] sm:$0xff]
        %v394 = vld [vmem:[%s225 + $0x3d8] sm:$0xff]
        %v395 = vld [vmem:[%s225 + $0x3e0] sm:$0xff]
        %v396 = vld [vmem:[%s225 + $0x3e8] sm:$0xff]
        %v397 = vld [vmem:[%s225 + $0x3f0] sm:$0xff]
        %v398 = vld [vmem:[%s225 + $0x3f8] sm:$0xff]
        %v399 = vld [vmem:[%s234] sm:$0xf]
        %v401 = vlaneseq
        %v402 = vshrl.u32 %v401, 7
        %v403 = vsub.s32 0, %v402
        %v404 = vrot.slane %v399, %v403
        %v405 = vlaneseq
        %v406 = vshrl.u32 %v405, 7
        %v407 = vsub.s32 1, %v406
        %v408 = vrot.slane %v399, %v407
        %v409 = vlaneseq
        %v410 = vshrl.u32 %v409, 7
        %v411 = vsub.s32 2, %v410
        %v412 = vrot.slane %v399, %v411
        %v413 = vlaneseq
        %v414 = vshrl.u32 %v413, 7
        %v415 = vsub.s32 3, %v414
        %v416 = vrot.slane %v399, %v415
        %421 = vmatprep.subr.mxu0 %v272
        %422 = vmatpush1.msra.mxu0 %v271
        %423 = vmatprep.subr.mxu0 %v276
        %424 = vmatpush1.msra.mxu0 %v275
        %425 = vmatprep.subr.mxu0 %v280
        %426 = vmatpush1.msra.mxu0 %v279
        %427 = vmatprep.subr.mxu0 %v284
        %428 = vmatpush1.msra.mxu0 %v283
        %429 = vmatprep.subr.mxu0 %v288
        %430 = vmatpush1.msra.mxu0 %v287
        %431 = vmatprep.subr.mxu0 %v292
        %432 = vmatpush1.msra.mxu0 %v291
        %433 = vmatprep.subr.mxu0 %v296
        %434 = vmatpush1.msra.mxu0 %v295
        %435 = vmatprep.subr.mxu0 %v300
        %436 = vmatpush1.msra.mxu0 %v299
        %437 = vmatprep.subr.mxu0 %v304
        %438 = vmatpush1.msra.mxu0 %v303
        %439 = vmatprep.subr.mxu0 %v308
        %440 = vmatpush1.msra.mxu0 %v307
        %441 = vmatprep.subr.mxu0 %v312
        %442 = vmatpush1.msra.mxu0 %v311
        %443 = vmatprep.subr.mxu0 %v316
        %444 = vmatpush1.msra.mxu0 %v315
        %445 = vmatprep.subr.mxu0 %v320
        %446 = vmatpush1.msra.mxu0 %v319
        %447 = vmatprep.subr.mxu0 %v324
        %448 = vmatpush1.msra.mxu0 %v323
        %449 = vmatprep.subr.mxu0 %v328
        %450 = vmatpush1.msra.mxu0 %v327
        %451 = vmatprep.subr.mxu0 %v332
        %452 = vmatpush1.msra.mxu0 %v331
        %453 = vmatprep.subr.mxu0 %v336
        %454 = vmatpush1.msra.mxu0 %v335
        %455 = vmatprep.subr.mxu0 %v340
        %456 = vmatpush1.msra.mxu0 %v339
        %457 = vmatprep.subr.mxu0 %v344
        %458 = vmatpush1.msra.mxu0 %v343
        %459 = vmatprep.subr.mxu0 %v348
        %460 = vmatpush1.msra.mxu0 %v347
        %461 = vmatprep.subr.mxu0 %v352
        %462 = vmatpush1.msra.mxu0 %v351
        %463 = vmatprep.subr.mxu0 %v356
        %464 = vmatpush1.msra.mxu0 %v355
        %465 = vmatprep.subr.mxu0 %v360
        %466 = vmatpush1.msra.mxu0 %v359
        %467 = vmatprep.subr.mxu0 %v364
        %468 = vmatpush1.msra.mxu0 %v363
        %469 = vmatprep.subr.mxu0 %v368
        %470 = vmatpush1.msra.mxu0 %v367
        %471 = vmatprep.subr.mxu0 %v372
        %472 = vmatpush1.msra.mxu0 %v371
        %473 = vmatprep.subr.mxu0 %v376
        %474 = vmatpush1.msra.mxu0 %v375
        %475 = vmatprep.subr.mxu0 %v380
        %476 = vmatpush1.msra.mxu0 %v379
        %477 = vmatprep.subr.mxu0 %v384
        %478 = vmatpush1.msra.mxu0 %v383
        %479 = vmatprep.subr.mxu0 %v388
        %480 = vmatpush1.msra.mxu0 %v387
        %481 = vmatprep.subr.mxu0 %v392
        %482 = vmatpush1.msra.mxu0 %v391
        %483 = vmatprep.subr.mxu0 %v396
        %484 = vmatpush1.msra.mxu0 %v395
        %485 = vmatprep.mubr.f32.mxu0 %v268
        %486 = vmatmul.mubr.f32.gmra.mrb[0].mxu0 %v267
        %v487 = vpop.f32.mrb[0].mxu0
        %v488 = vadd.f32 %v404, %v487
        %v489 = vpop.f32.mrb[0].mxu0
        %v490 = vadd.f32 %v408, %v489
        %491 = vmatprep.mubr.f32.mxu0 %v270
        %492 = vmatmul.mubr.f32.gmra.mrb[0].mxu0 %v269
        %v493 = vpop.f32.mrb[0].mxu0
        %v494 = vadd.f32 %v404, %v493
        %v495 = vpop.f32.mrb[0].mxu0
        %v496 = vadd.f32 %v408, %v495
        %497 = vdwg.mxu0
        %498 = vmatprep.subr.mxu0 %v274
        %499 = vmatpush1.msra.mxu0 %v273
        %500 = vmatprep.subr.mxu0 %v278
        %501 = vmatpush1.msra.mxu0 %v277
        %502 = vmatprep.subr.mxu0 %v282
        %503 = vmatpush1.msra.mxu0 %v281
        %504 = vmatprep.subr.mxu0 %v286
        %505 = vmatpush1.msra.mxu0 %v285
        %506 = vmatprep.subr.mxu0 %v290
        %507 = vmatpush1.msra.mxu0 %v289
        %508 = vmatprep.subr.mxu0 %v294
        %509 = vmatpush1.msra.mxu0 %v293
        %510 = vmatprep.subr.mxu0 %v298
        %511 = vmatpush1.msra.mxu0 %v297
        %512 = vmatprep.subr.mxu0 %v302
        %513 = vmatpush1.msra.mxu0 %v301
        %514 = vmatprep.subr.mxu0 %v306
        %515 = vmatpush1.msra.mxu0 %v305
        %516 = vmatprep.subr.mxu0 %v310
        %517 = vmatpush1.msra.mxu0 %v309
        %518 = vmatprep.subr.mxu0 %v314
        %519 = vmatpush1.msra.mxu0 %v313
        %520 = vmatprep.subr.mxu0 %v318
        %521 = vmatpush1.msra.mxu0 %v317
        %522 = vmatprep.subr.mxu0 %v322
        %523 = vmatpush1.msra.mxu0 %v321
        %524 = vmatprep.subr.mxu0 %v326
        %525 = vmatpush1.msra.mxu0 %v325
        %526 = vmatprep.subr.mxu0 %v330
        %527 = vmatpush1.msra.mxu0 %v329
        %528 = vmatprep.subr.mxu0 %v334
        %529 = vmatpush1.msra.mxu0 %v333
        %530 = vmatprep.subr.mxu0 %v338
        %531 = vmatpush1.msra.mxu0 %v337
        %532 = vmatprep.subr.mxu0 %v342
        %533 = vmatpush1.msra.mxu0 %v341
        %534 = vmatprep.subr.mxu0 %v346
        %535 = vmatpush1.msra.mxu0 %v345
        %536 = vmatprep.subr.mxu0 %v350
        %537 = vmatpush1.msra.mxu0 %v349
        %538 = vmatprep.subr.mxu0 %v354
        %539 = vmatpush1.msra.mxu0 %v353
        %540 = vmatprep.subr.mxu0 %v358
        %541 = vmatpush1.msra.mxu0 %v357
        %542 = vmatprep.subr.mxu0 %v362
        %543 = vmatpush1.msra.mxu0 %v361
        %544 = vmatprep.subr.mxu0 %v366
        %545 = vmatpush1.msra.mxu0 %v365
        %546 = vmatprep.subr.mxu0 %v370
        %547 = vmatpush1.msra.mxu0 %v369
        %548 = vmatprep.subr.mxu0 %v374
        %549 = vmatpush1.msra.mxu0 %v373
        %550 = vmatprep.subr.mxu0 %v378
        %551 = vmatpush1.msra.mxu0 %v377
        %552 = vmatprep.subr.mxu0 %v382
        %553 = vmatpush1.msra.mxu0 %v381
        %554 = vmatprep.subr.mxu0 %v386
        %555 = vmatpush1.msra.mxu0 %v385
        %556 = vmatprep.subr.mxu0 %v390
        %557 = vmatpush1.msra.mxu0 %v389
        %558 = vmatprep.subr.mxu0 %v394
        %559 = vmatpush1.msra.mxu0 %v393
        %560 = vmatprep.subr.mxu0 %v398
        %561 = vmatpush1.msra.mxu0 %v397
        %562 = vmatprep.mubr.f32.mxu0 %v268
        %563 = vmatmul.mubr.f32.gmra.mrb[0].mxu0 %v267
        %v564 = vpop.f32.mrb[0].mxu0
        %v565 = vadd.f32 %v412, %v564
        %v566 = vpop.f32.mrb[0].mxu0
        %v567 = vadd.f32 %v416, %v566
        %568 = vmatprep.mubr.f32.mxu0 %v270
        %569 = vmatmul.mubr.f32.gmra.mrb[0].mxu0 %v269
        %v570 = vpop.f32.mrb[0].mxu0
        %v571 = vadd.f32 %v412, %v570
        %v572 = vpop.f32.mrb[0].mxu0
        %v573 = vadd.f32 %v416, %v572
        %574 = vdwg.mxu0
        %575 = vst [vmem:[%s261] sm:$0xff] %v488
        %576 = vst [vmem:[%s261 + $0x8] sm:$0xff] %v490
        %577 = vst [vmem:[%s261 + $0x10] sm:$0xff] %v565
        %578 = vst [vmem:[%s261 + $0x18] sm:$0xff] %v567
        %579 = vst [vmem:[%s261 + $0x20] sm:$0xff] %v494
        %580 = vst [vmem:[%s261 + $0x28] sm:$0xff] %v496
        %581 = vst [vmem:[%s261 + $0x30] sm:$0xff] %v571
        %582 = vst [vmem:[%s261 + $0x38] sm:$0xff] %v573
        %s583 = sand.u32 %s121, 1
        %s584 = scalar_lea.sflag [#allocation4], %s583
        %s585 = sand.u32 %s121, 1
        %s586 = smul.addr %s585, 64
        %s587 = scalar_lea.vmem [#allocation8], %s586
        // Predicated region
        $region45: #{lstm_forward.8} parent=31 // pred_check
          %p588 = pneg %p131
        $region46: #{lstm_forward.8} parent=31 // pred_check_branch
          %590 = sbr.rel (%p588) target = $region48
        $region47: #{lstm_forward.8} parent=31 // pred_region
          %s591 = smul.u32 2, %s25
          %s592 = smul.u32 4, %s26
          %s594 = ssub.s32 1024, 1024
          %595 = vsyncadd %s584, %s594
          %s596 = smul.addr %s591, 8
          %s597 = sadd.s32 %s592, %s596
          %s598 = smul.addr %s597, 128
          %s599 = scalar_lea.hbm %s3, %s598
          %s600 = sshll.u32 %s587, 4
          %s601 = int_to_ptr.vmem [resolvable:$true] %s600
          %606 = dma.vmem_to_hbm [thread:$0]  %s601, 1024, %s599, %s584, 512, 1024, 32
        $region48: #{lstm_forward.8} parent=31 // pred_fallthru
          _
      $region32: #{lstm_forward.8} parent=5 // pred_fallthru
        _
      %p607 = scmp.le.s32.totalorder 2, %s16
      // Predicated region
      $region49: #{lstm_forward.8} parent=5 // pred_check
        %p608 = pneg %p607
      $region50: #{lstm_forward.8} parent=5 // pred_check_branch
        %610 = sbr.rel (%p608) target = $region52
      $region51: #{lstm_forward.8} parent=5 // pred_region
        %s611 = ssub.s32 %s16, 2
        // Predicated region
        $region53: #{lstm_forward.8} parent=51 // pred_check
          %p612 = pneg %p137
        $region54: #{lstm_forward.8} parent=51 // pred_check_branch
          %614 = sbr.rel (%p612) target = $region56
        $region55: #{lstm_forward.8} parent=51 // pred_region
          %s615 = sand.u32 %s122, 1
          %s616 = scalar_lea.sflag [#allocation4], %s615
          %s617 = sand.u32 %s122, 1
          %s618 = smul.addr %s617, 64
          %s619 = scalar_lea.vmem [#allocation8], %s618
          %620 = dma.done %s616, 1024
        $region56: #{lstm_forward.8} parent=51 // pred_fallthru
          _
      $region52: #{lstm_forward.8} parent=5 // pred_fallthru
        _
    $region6: #{lstm_forward.8} parent=1 // loop_footer
      %s20 = sadd.s32 1, %s16
    $region7: #{lstm_forward.8} parent=1 // loop_footer_branch
      %15 = sbr.rel target = $region3
    $region8: #{lstm_forward.8} parent=1 // loop_exit
      _
    %621 = vsyncpa [#allocation3], 1
    %s622 = scalar_lea.sflag [#allocation3], 1
    %623 = vsyncpa %s622, 1
    %624 = vsyncpa [#allocation6], 1
    %s625 = scalar_lea.sflag [#allocation6], 1
    %626 = vsyncpa %s625, 1
    %627 = vsyncpa [#allocation4], 1
    %s628 = scalar_lea.sflag [#allocation4], 1
    %629 = vsyncpa %s628, 1

// kernel: lstm_forward.7
$region0: #{lstm_forward.7}
  #allocation0 [shape = 'u32[]', space=smem, size = 0x4, offset = 0x4, fixed_abs, tag = 'smem constant byte address 0x4 - core index']
  #allocation1 [shape = 'u32[144,128]{1,0:T(1,128)}', space=vmem, size = 0x12000, scoped, tag = 'internal scratch']
  #allocation2 [shape = 'f32[2,256]{1,0:T(2,128)}', space=vmem, size = 0x800, scoped, tag = 'scratch operand']
  #allocation3 [shape = 'f32[2,256]{1,0:T(2,128)}', space=vmem, size = 0x800, scoped, tag = 'scratch operand']
  %s0 = inlined_call_operand.hbm [shape: f32[8,2,1024], index: 0, kind: input, shape index: {}]
  %s1 = inlined_call_operand.hbm [shape: f32[256,1024], index: 1, kind: input, shape index: {}]
  %s2 = inlined_call_operand.hbm [shape: f32[8,2,256], index: 2, kind: output, shape index: {0}]
  %s3 = inlined_call_operand.hbm [shape: f32[2,256], index: 3, kind: output, shape index: {1}]
  %s4 = inlined_call_operand.hbm [shape: f32[2,256], index: 4, kind: output, shape index: {2}]
  %5 = xla_tuple %s2, %s3, %s4
  %s6 = sld [smem:[#allocation0]]
  $region69: #{lstm_forward.7} parent=0
    _
  %s8 = ssub.s32 1, %s6
  %s9 = scalar_select 0, %s8, %s6
  $region1: #{lstm_forward.7} parent=0
    #allocation4 [shape = 'u8[16384]{0}', space=vmem, size = 0x4000, scoped, tag = 'input window, operand 0']
    #allocation5 [shape = 's32[2]{0}', space=sflag, size = 0x8, scoped, tag = 'scoped memory for lstm_forward.7']
    #allocation6 [shape = 's32[2]{0}', space=sflag, size = 0x8, scoped, tag = 'scoped memory for lstm_forward.7']
    #allocation7 [shape = 'u8[1048576]{0}', space=vmem, size = 0x100000, scoped, tag = 'input window, operand 1, single buffered']
    #allocation8 [shape = 's32[1]{0}', space=sflag, size = 0x4, scoped, tag = 'scoped memory for lstm_forward.7']
    #allocation9 [shape = 'u8[4096]{0}', space=vmem, size = 0x1000, scoped, tag = 'output window, operand 0']
    #allocation10 [shape = 'u8[2048]{0}', space=vmem, size = 0x800, scoped, tag = 'output window, operand 1, single buffered']
    #allocation11 [shape = 's32[1]{0}', space=sflag, size = 0x4, scoped, tag = 'scoped memory for lstm_forward.7']
    #allocation12 [shape = 'u8[2048]{0}', space=vmem, size = 0x800, scoped, tag = 'output window, operand 2, single buffered']
    %10 = vsyncpa [#allocation5], 0
    %s11 = scalar_lea.sflag [#allocation5], 1
    %12 = vsyncpa %s11, 0
    %13 = vsyncpa [#allocation8], 0
    %14 = vsyncpa [#allocation6], 0
    %s15 = scalar_lea.sflag [#allocation6], 1
    %16 = vsyncpa %s15, 0
    %17 = vsyncpa [#allocation11], 0
    loop: start=0, step=1, limit=10
    $region2: #{lstm_forward.7} parent=1 // loop_pre_header
      _
    $region3: #{lstm_forward.7} parent=1 // loop_header
      %s19 = sphi 0, %s23
      %p20 = scmp.ge.s32.totalorder %s19, 10
      %s29 = sphi 0, %s31
      %s32 = sphi 0, %s29
      %s33 = sphi 0, %s32
      %s49 = sphi 0, %s33
      %s53 = sphi 0, %s53
      %s55 = sphi 0, %s53
      %s56 = sphi 0, %s55
      %s70 = sphi 0, %s56
      %s76 = sphi 0, %s78
      %s79 = sphi 0, %s76
      %s80 = sphi 0, %s79
      %s96 = sphi 0, %s80
      %s100 = sphi 0, %s100
      %s102 = sphi 0, %s100
      %s103 = sphi 0, %s102
      %s117 = sphi 0, %s103
      %s121 = sphi 0, %s121
      %s123 = sphi 0, %s121
      %s124 = sphi 0, %s123
      %s138 = sphi 0, %s124
    $region4: #{lstm_forward.7} parent=1 // loop_header_branch
      %22 = sbr.rel (%p20) target = $region8
    $region5: #{lstm_forward.7} parent=1 // loop_body
      %s24 = ssub.s32 %s19, 1
      %s25 = ssub.s32 %s19, 2
      %s26 = sadd.s32 %s19, 1
      %s27 = ssub.s32 %s19, %s26
      %p28 = scmp.eq.s32.totalorder %s27, 0
      %s30 = sadd.s32 %s29, 1
      %s31 = scalar_select %p28, %s29, %s30
      %p34 = pneg %p28
      %p35 = scmp.eq.s32.totalorder %s19, 7
      %p36 = por %p34, %p35
      %p37 = scmp.ne.s32.totalorder %s29, %s32
      %p38 = scmp.eq.s32.totalorder %s19, 0
      %p39 = por %p37, %p38
      %p40 = scmp.ne.s32.totalorder %s29, %s32
      %p41 = scmp.eq.s32.totalorder %s24, 7
      %p42 = por %p40, %p41
      %p43 = scmp.ne.s32.totalorder %s32, %s33
      %p44 = scmp.eq.s32.totalorder %s24, 0
      %p45 = por %p43, %p44
      %p46 = scmp.ne.s32.totalorder %s32, %s33
      %p47 = scmp.eq.s32.totalorder %s25, 7
      %p48 = por %p46, %p47
      %p50 = scmp.ne.s32.totalorder %s33, %s49
      %p51 = scmp.eq.s32.totalorder %s25, 0
      %p52 = por %p50, %p51
      %s54 = sadd.s32 %s53, 1
      %p57 = scmp.eq.s32.totalorder %s19, 7
      %p58 = scmp.ne.s32.totalorder %s53, %s55
      %p59 = scmp.eq.s32.totalorder %s19, 0
      %p60 = por %p58, %p59
      %p61 = scmp.ne.s32.totalorder %s53, %s55
      %p62 = scmp.eq.s32.totalorder %s24, 7
      %p63 = por %p61, %p62
      %p64 = scmp.ne.s32.totalorder %s55, %s56
      %p65 = scmp.eq.s32.totalorder %s24, 0
      %p66 = por %p64, %p65
      %p67 = scmp.ne.s32.totalorder %s55, %s56
      %p68 = scmp.eq.s32.totalorder %s25, 7
      %p69 = por %p67, %p68
      %p71 = scmp.ne.s32.totalorder %s56, %s70
      %p72 = scmp.eq.s32.totalorder %s25, 0
      %p73 = por %p71, %p72
      %s74 = ssub.s32 %s19, %s26
      %p75 = scmp.eq.s32.totalorder %s74, 0
      %s77 = sadd.s32 %s76, 1
      %s78 = scalar_select %p75, %s76, %s77
      %p81 = pneg %p75
      %p82 = scmp.eq.s32.totalorder %s19, 7
      %p83 = por %p81, %p82
      %p84 = scmp.ne.s32.totalorder %s76, %s79
      %p85 = scmp.eq.s32.totalorder %s19, 0
      %p86 = por %p84, %p85
      %p87 = scmp.ne.s32.totalorder %s76, %s79
      %p88 = scmp.eq.s32.totalorder %s24, 7
      %p89 = por %p87, %p88
      %p90 = scmp.ne.s32.totalorder %s79, %s80
      %p91 = scmp.eq.s32.totalorder %s24, 0
      %p92 = por %p90, %p91
      %p93 = scmp.ne.s32.totalorder %s79, %s80
      %p94 = scmp.eq.s32.totalorder %s25, 7
      %p95 = por %p93, %p94
      %p97 = scmp.ne.s32.totalorder %s80, %s96
      %p98 = scmp.eq.s32.totalorder %s25, 0
      %p99 = por %p97, %p98
      %s101 = sadd.s32 %s100, 1
      %p104 = scmp.eq.s32.totalorder %s19, 7
      %p105 = scmp.ne.s32.totalorder %s100, %s102
      %p106 = scmp.eq.s32.totalorder %s19, 0
      %p107 = por %p105, %p106
      %p108 = scmp.ne.s32.totalorder %s100, %s102
      %p109 = scmp.eq.s32.totalorder %s24, 7
      %p110 = por %p108, %p109
      %p111 = scmp.ne.s32.totalorder %s102, %s103
      %p112 = scmp.eq.s32.totalorder %s24, 0
      %p113 = por %p111, %p112
      %p114 = scmp.ne.s32.totalorder %s102, %s103
      %p115 = scmp.eq.s32.totalorder %s25, 7
      %p116 = por %p114, %p115
      %p118 = scmp.ne.s32.totalorder %s103, %s117
      %p119 = scmp.eq.s32.totalorder %s25, 0
      %p120 = por %p118, %p119
      %s122 = sadd.s32 %s121, 1
      %p125 = scmp.eq.s32.totalorder %s19, 7
      %p126 = scmp.ne.s32.totalorder %s121, %s123
      %p127 = scmp.eq.s32.totalorder %s19, 0
      %p128 = por %p126, %p127
      %p129 = scmp.ne.s32.totalorder %s121, %s123
      %p130 = scmp.eq.s32.totalorder %s24, 7
      %p131 = por %p129, %p130
      %p132 = scmp.ne.s32.totalorder %s123, %s124
      %p133 = scmp.eq.s32.totalorder %s24, 0
      %p134 = por %p132, %p133
      %p135 = scmp.ne.s32.totalorder %s123, %s124
      %p136 = scmp.eq.s32.totalorder %s25, 7
      %p137 = por %p135, %p136
      %p139 = scmp.ne.s32.totalorder %s124, %s138
      %p140 = scmp.eq.s32.totalorder %s25, 0
      %p141 = por %p139, %p140
      %p142 = scmp.le.s32.totalorder 1, %s19
      %p143 = scmp.lt.s32.totalorder %s19, 9
      %p144 = pnand %p142, %p143
      %p145 = pneg %p144
      // Predicated region
      $region9: #{lstm_forward.7} parent=5 // pred_check
        _
      $region10: #{lstm_forward.7} parent=5 // pred_check_branch
        %147 = sbr.rel (%p144) target = $region12
      $region11: #{lstm_forward.7} parent=5 // pred_region
        %s148 = ssub.s32 %s19, 1
        // Predicated region
        $region13: #{lstm_forward.7} parent=11 // pred_check
          %p149 = pneg %p66
        $region14: #{lstm_forward.7} parent=11 // pred_check_branch
          %151 = sbr.rel (%p149) target = $region16
        $region15: #{lstm_forward.7} parent=11 // pred_region
          %s153 = ssub.s32 32768, 32768
          %154 = vsyncadd [#allocation8], %s153
          %s155 = sshll.u32 [#allocation7], 4
          %s156 = int_to_ptr.vmem [resolvable:$true] %s155
          %161 = dma.hbm_to_vmem [thread:$0]  %s1, 32768, %s156, [#allocation8], 1024, 1024, 64
        $region16: #{lstm_forward.7} parent=11 // pred_fallthru
          _
      $region12: #{lstm_forward.7} parent=5 // pred_fallthru
        _
      %p162 = scmp.lt.s32.totalorder %s19, 8
      // Predicated region
      $region17: #{lstm_forward.7} parent=5 // pred_check
        %p163 = pneg %p162
      $region18: #{lstm_forward.7} parent=5 // pred_check_branch
        %165 = sbr.rel (%p163) target = $region20
      $region19: #{lstm_forward.7} parent=5 // pred_region
        // Predicated region
        $region21: #{lstm_forward.7} parent=19 // pred_check
          %p166 = pneg %p39
        $region22: #{lstm_forward.7} parent=19 // pred_check_branch
          %168 = sbr.rel (%p166) target = $region24
        $region23: #{lstm_forward.7} parent=19 // pred_region
          %s169 = sand.u32 %s29, 1
          %s170 = scalar_lea.sflag [#allocation5], %s169
          %s171 = sand.u32 %s29, 1
          %s172 = smul.addr %s171, 16
          %s173 = scalar_lea.vmem [#allocation4], %s172
          %s175 = ssub.s32 256, 256
          %176 = vsyncadd %s170, %s175
          %s177 = smul.addr %s19, 8
          %s178 = smul.addr %s177, 32
          %s179 = scalar_lea.hbm %s0, %s178
          %s181 = sshll.u32 %s173, 4
          %s182 = int_to_ptr.vmem [resolvable:$true] %s181
          %184 = dma.hbm_to_vmem [thread:$0]  %s179, 256, %s182, %s170
        $region24: #{lstm_forward.7} parent=19 // pred_fallthru
          _
      $region20: #{lstm_forward.7} parent=5 // pred_fallthru
        _
      %p185 = scmp.le.s32.totalorder 1, %s19
      %p186 = scmp.lt.s32.totalorder %s19, 9
      %p187 = pnand %p185, %p186
      %p188 = pneg %p187
      // Predicated region
      $region25: #{lstm_forward.7} parent=5 // pred_check
        _
      $region26: #{lstm_forward.7} parent=5 // pred_check_branch
        %190 = sbr.rel (%p187) target = $region28
      $region27: #{lstm_forward.7} parent=5 // pred_region
        %s191 = ssub.s32 %s19, 1
        %s192 = sand.u32 %s32, 1
        %s193 = scalar_lea.sflag [#allocation5], %s192
        %s194 = sand.u32 %s32, 1
        %s195 = smul.addr %s194, 16
        %s196 = scalar_lea.vmem [#allocation4], %s195
        // Predicated region
        $region29: #{lstm_forward.7} parent=27 // pred_check
          %p197 = pneg %p45
        $region30: #{lstm_forward.7} parent=27 // pred_check_branch
          %199 = sbr.rel (%p197) target = $region32
        $region31: #{lstm_forward.7} parent=27 // pred_region
          %200 = dma.done %s193, 256
        $region32: #{lstm_forward.7} parent=27 // pred_fallthru
          _
        // Predicated region
        $region33: #{lstm_forward.7} parent=27 // pred_check
          %p201 = pneg %p66
        $region34: #{lstm_forward.7} parent=27 // pred_check_branch
          %203 = sbr.rel (%p201) target = $region36
        $region35: #{lstm_forward.7} parent=27 // pred_region
          %204 = dma.done [#allocation8], 32768
        $region36: #{lstm_forward.7} parent=27 // pred_fallthru
          _
        %s205 = sand.u32 %s32, 1
        %s206 = scalar_lea.sflag [#allocation5], %s205
        %s207 = sand.u32 %s32, 1
        %s208 = smul.addr %s207, 16
        %s209 = scalar_lea.vmem [#allocation4], %s208
        %p210 = pneg %p45
        %p211 = pneg %p42
        %p212 = pneg %p66
        %p213 = pneg %p63
        %p214 = pneg %p92
        %p215 = pneg %p89
        %s216 = sand.u32 %s79, 1
        %s217 = scalar_lea.sflag [#allocation6], %s216
        %s218 = sand.u32 %s79, 1
        %s219 = smul.addr %s218, 4
        %s220 = scalar_lea.vmem [#allocation9], %s219
        %p221 = pneg %p113
        %p222 = pneg %p110
        %p223 = pneg %p134
        %p224 = pneg %p131
        %p225 = scmp.eq.s32.totalorder %s24, 0
        // Predicated region
        $region37: #{lstm_forward.7} parent=27 // pred_check
          %p226 = pneg %p225
        $region38: #{lstm_forward.7} parent=27 // pred_check_branch
          %228 = sbr.rel (%p226) target = $region40
        $region39: #{lstm_forward.7} parent=27 // pred_region
          %229 = vst [vmem:[#allocation2] sm:$0xf] 0.0
          %230 = vst [vmem:[#allocation3] sm:$0xf] 0.0
        $region40: #{lstm_forward.7} parent=27 // pred_fallthru
          _
        %v231 = vld [vmem:[#allocation2] sm:$0xf]
        %v232 = vld [vmem:[#allocation3] sm:$0xf]
        %v233 = vld [vmem:[%s196] sm:$0xff]
        %v234 = vld [vmem:[%s196 + $0x8] sm:$0xff]
        %v235 = vld [vmem:[#allocation7] sm:$0xff]
        %v236 = vld [vmem:[#allocation7 + $0x8] sm:$0xff]
        %v237 = vld [vmem:[#allocation7 + $0x10] sm:$0xff]
        %v238 = vld [vmem:[#allocation7 + $0x18] sm:$0xff]
        %v239 = vld [vmem:[#allocation7 + $0x20] sm:$0xff]
        %v240 = vld [vmem:[#allocation7 + $0x28] sm:$0xff]
        %v241 = vld [vmem:[#allocation7 + $0x30] sm:$0xff]
        %v242 = vld [vmem:[#allocation7 + $0x38] sm:$0xff]
        %v243 = vld [vmem:[#allocation7 + $0x40] sm:$0xff]
        %v244 = vld [vmem:[#allocation7 + $0x48] sm:$0xff]
        %v245 = vld [vmem:[#allocation7 + $0x50] sm:$0xff]
        %v246 = vld [vmem:[#allocation7 + $0x58] sm:$0xff]
        %v247 = vld [vmem:[#allocation7 + $0x60] sm:$0xff]
        %v248 = vld [vmem:[#allocation7 + $0x68] sm:$0xff]
        %v249 = vld [vmem:[#allocation7 + $0x70] sm:$0xff]
        %v250 = vld [vmem:[#allocation7 + $0x78] sm:$0xff]
        %v251 = vld [vmem:[#allocation7 + $0x80] sm:$0xff]
        %v252 = vld [vmem:[#allocation7 + $0x88] sm:$0xff]
        %v253 = vld [vmem:[#allocation7 + $0x90] sm:$0xff]
        %v254 = vld [vmem:[#allocation7 + $0x98] sm:$0xff]
        %v255 = vld [vmem:[#allocation7 + $0xa0] sm:$0xff]
        %v256 = vld [vmem:[#allocation7 + $0xa8] sm:$0xff]
        %v257 = vld [vmem:[#allocation7 + $0xb0] sm:$0xff]
        %v258 = vld [vmem:[#allocation7 + $0xb8] sm:$0xff]
        %v259 = vld [vmem:[#allocation7 + $0xc0] sm:$0xff]
        %v260 = vld [vmem:[#allocation7 + $0xc8] sm:$0xff]
        %v261 = vld [vmem:[#allocation7 + $0xd0] sm:$0xff]
        %v262 = vld [vmem:[#allocation7 + $0xd8] sm:$0xff]
        %v263 = vld [vmem:[#allocation7 + $0xe0] sm:$0xff]
        %v264 = vld [vmem:[#allocation7 + $0xe8] sm:$0xff]
        %v265 = vld [vmem:[#allocation7 + $0xf0] sm:$0xff]
        %v266 = vld [vmem:[#allocation7 + $0xf8] sm:$0xff]
        %v267 = vld [vmem:[#allocation7 + $0x100] sm:$0xff]
        %v268 = vld [vmem:[#allocation7 + $0x108] sm:$0xff]
        %v269 = vld [vmem:[#allocation7 + $0x110] sm:$0xff]
        %v270 = vld [vmem:[#allocation7 + $0x118] sm:$0xff]
        %v271 = vld [vmem:[#allocation7 + $0x120] sm:$0xff]
        %v272 = vld [vmem:[#allocation7 + $0x128] sm:$0xff]
        %v273 = vld [vmem:[#allocation7 + $0x130] sm:$0xff]
        %v274 = vld [vmem:[#allocation7 + $0x138] sm:$0xff]
        %v275 = vld [vmem:[#allocation7 + $0x140] sm:$0xff]
        %v276 = vld [vmem:[#allocation7 + $0x148] sm:$0xff]
        %v277 = vld [vmem:[#allocation7 + $0x150] sm:$0xff]
        %v278 = vld [vmem:[#allocation7 + $0x158] sm:$0xff]
        %v279 = vld [vmem:[#allocation7 + $0x160] sm:$0xff]
        %v280 = vld [vmem:[#allocation7 + $0x168] sm:$0xff]
        %v281 = vld [vmem:[#allocation7 + $0x170] sm:$0xff]
        %v282 = vld [vmem:[#allocation7 + $0x178] sm:$0xff]
        %v283 = vld [vmem:[#allocation7 + $0x180] sm:$0xff]
        %v284 = vld [vmem:[#allocation7 + $0x188] sm:$0xff]
        %v285 = vld [vmem:[#allocation7 + $0x190] sm:$0xff]
        %v286 = vld [vmem:[#allocation7 + $0x198] sm:$0xff]
        %v287 = vld [vmem:[#allocation7 + $0x1a0] sm:$0xff]
        %v288 = vld [vmem:[#allocation7 + $0x1a8] sm:$0xff]
        %v289 = vld [vmem:[#allocation7 + $0x1b0] sm:$0xff]
        %v290 = vld [vmem:[#allocation7 + $0x1b8] sm:$0xff]
        %v291 = vld [vmem:[#allocation7 + $0x1c0] sm:$0xff]
        %v292 = vld [vmem:[#allocation7 + $0x1c8] sm:$0xff]
        %v293 = vld [vmem:[#allocation7 + $0x1d0] sm:$0xff]
        %v294 = vld [vmem:[#allocation7 + $0x1d8] sm:$0xff]
        %v295 = vld [vmem:[#allocation7 + $0x1e0] sm:$0xff]
        %v296 = vld [vmem:[#allocation7 + $0x1e8] sm:$0xff]
        %v297 = vld [vmem:[#allocation7 + $0x1f0] sm:$0xff]
        %v298 = vld [vmem:[#allocation7 + $0x1f8] sm:$0xff]
        %v299 = vld [vmem:[#allocation7 + $0x200] sm:$0xff]
        %v300 = vld [vmem:[#allocation7 + $0x208] sm:$0xff]
        %v301 = vld [vmem:[#allocation7 + $0x210] sm:$0xff]
        %v302 = vld [vmem:[#allocation7 + $0x218] sm:$0xff]
        %v303 = vld [vmem:[#allocation7 + $0x220] sm:$0xff]
        %v304 = vld [vmem:[#allocation7 + $0x228] sm:$0xff]
        %v305 = vld [vmem:[#allocation7 + $0x230] sm:$0xff]
        %v306 = vld [vmem:[#allocation7 + $0x238] sm:$0xff]
        %v307 = vld [vmem:[#allocation7 + $0x240] sm:$0xff]
        %v308 = vld [vmem:[#allocation7 + $0x248] sm:$0xff]
        %v309 = vld [vmem:[#allocation7 + $0x250] sm:$0xff]
        %v310 = vld [vmem:[#allocation7 + $0x258] sm:$0xff]
        %v311 = vld [vmem:[#allocation7 + $0x260] sm:$0xff]
        %v312 = vld [vmem:[#allocation7 + $0x268] sm:$0xff]
        %v313 = vld [vmem:[#allocation7 + $0x270] sm:$0xff]
        %v314 = vld [vmem:[#allocation7 + $0x278] sm:$0xff]
        %v315 = vld [vmem:[#allocation7 + $0x280] sm:$0xff]
        %v316 = vld [vmem:[#allocation7 + $0x288] sm:$0xff]
        %v317 = vld [vmem:[#allocation7 + $0x290] sm:$0xff]
        %v318 = vld [vmem:[#allocation7 + $0x298] sm:$0xff]
        %v319 = vld [vmem:[#allocation7 + $0x2a0] sm:$0xff]
        %v320 = vld [vmem:[#allocation7 + $0x2a8] sm:$0xff]
        %v321 = vld [vmem:[#allocation7 + $0x2b0] sm:$0xff]
        %v322 = vld [vmem:[#allocation7 + $0x2b8] sm:$0xff]
        %v323 = vld [vmem:[#allocation7 + $0x2c0] sm:$0xff]
        %v324 = vld [vmem:[#allocation7 + $0x2c8] sm:$0xff]
        %v325 = vld [vmem:[#allocation7 + $0x2d0] sm:$0xff]
        %v326 = vld [vmem:[#allocation7 + $0x2d8] sm:$0xff]
        %v327 = vld [vmem:[#allocation7 + $0x2e0] sm:$0xff]
        %v328 = vld [vmem:[#allocation7 + $0x2e8] sm:$0xff]
        %v329 = vld [vmem:[#allocation7 + $0x2f0] sm:$0xff]
        %v330 = vld [vmem:[#allocation7 + $0x2f8] sm:$0xff]
        %v331 = vld [vmem:[#allocation7 + $0x300] sm:$0xff]
        %v332 = vld [vmem:[#allocation7 + $0x308] sm:$0xff]
        %v333 = vld [vmem:[#allocation7 + $0x310] sm:$0xff]
        %v334 = vld [vmem:[#allocation7 + $0x318] sm:$0xff]
        %v335 = vld [vmem:[#allocation7 + $0x320] sm:$0xff]
        %v336 = vld [vmem:[#allocation7 + $0x328] sm:$0xff]
        %v337 = vld [vmem:[#allocation7 + $0x330] sm:$0xff]
        %v338 = vld [vmem:[#allocation7 + $0x338] sm:$0xff]
        %v339 = vld [vmem:[#allocation7 + $0x340] sm:$0xff]
        %v340 = vld [vmem:[#allocation7 + $0x348] sm:$0xff]
        %v341 = vld [vmem:[#allocation7 + $0x350] sm:$0xff]
        %v342 = vld [vmem:[#allocation7 + $0x358] sm:$0xff]
        %v343 = vld [vmem:[#allocation7 + $0x360] sm:$0xff]
        %v344 = vld [vmem:[#allocation7 + $0x368] sm:$0xff]
        %v345 = vld [vmem:[#allocation7 + $0x370] sm:$0xff]
        %v346 = vld [vmem:[#allocation7 + $0x378] sm:$0xff]
        %v347 = vld [vmem:[#allocation7 + $0x380] sm:$0xff]
        %v348 = vld [vmem:[#allocation7 + $0x388] sm:$0xff]
        %v349 = vld [vmem:[#allocation7 + $0x390] sm:$0xff]
        %v350 = vld [vmem:[#allocation7 + $0x398] sm:$0xff]
        %v351 = vld [vmem:[#allocation7 + $0x3a0] sm:$0xff]
        %v352 = vld [vmem:[#allocation7 + $0x3a8] sm:$0xff]
        %v353 = vld [vmem:[#allocation7 + $0x3b0] sm:$0xff]
        %v354 = vld [vmem:[#allocation7 + $0x3b8] sm:$0xff]
        %v355 = vld [vmem:[#allocation7 + $0x3c0] sm:$0xff]
        %v356 = vld [vmem:[#allocation7 + $0x3c8] sm:$0xff]
        %v357 = vld [vmem:[#allocation7 + $0x3d0] sm:$0xff]
        %v358 = vld [vmem:[#allocation7 + $0x3d8] sm:$0xff]
        %v359 = vld [vmem:[#allocation7 + $0x3e0] sm:$0xff]
        %v360 = vld [vmem:[#allocation7 + $0x3e8] sm:$0xff]
        %v361 = vld [vmem:[#allocation7 + $0x3f0] sm:$0xff]
        %v362 = vld [vmem:[#allocation7 + $0x3f8] sm:$0xff]
        %v363 = vld [vmem:[#allocation7 + $0x400] sm:$0xff]
        %v364 = vld [vmem:[#allocation7 + $0x408] sm:$0xff]
        %v365 = vld [vmem:[#allocation7 + $0x410] sm:$0xff]
        %v366 = vld [vmem:[#allocation7 + $0x418] sm:$0xff]
        %v367 = vld [vmem:[#allocation7 + $0x420] sm:$0xff]
        %v368 = vld [vmem:[#allocation7 + $0x428] sm:$0xff]
        %v369 = vld [vmem:[#allocation7 + $0x430] sm:$0xff]
        %v370 = vld [vmem:[#allocation7 + $0x438] sm:$0xff]
        %v371 = vld [vmem:[#allocation7 + $0x440] sm:$0xff]
        %v372 = vld [vmem:[#allocation7 + $0x448] sm:$0xff]
        %v373 = vld [vmem:[#allocation7 + $0x450] sm:$0xff]
        %v374 = vld [vmem:[#allocation7 + $0x458] sm:$0xff]
        %v375 = vld [vmem:[#allocation7 + $0x460] sm:$0xff]
        %v376 = vld [vmem:[#allocation7 + $0x468] sm:$0xff]
        %v377 = vld [vmem:[#allocation7 + $0x470] sm:$0xff]
        %v378 = vld [vmem:[#allocation7 + $0x478] sm:$0xff]
        %v379 = vld [vmem:[#allocation7 + $0x480] sm:$0xff]
        %v380 = vld [vmem:[#allocation7 + $0x488] sm:$0xff]
        %v381 = vld [vmem:[#allocation7 + $0x490] sm:$0xff]
        %v382 = vld [vmem:[#allocation7 + $0x498] sm:$0xff]
        %v383 = vld [vmem:[#allocation7 + $0x4a0] sm:$0xff]
        %v384 = vld [vmem:[#allocation7 + $0x4a8] sm:$0xff]
        %v385 = vld [vmem:[#allocation7 + $0x4b0] sm:$0xff]
        %v386 = vld [vmem:[#allocation7 + $0x4b8] sm:$0xff]
        %v387 = vld [vmem:[#allocation7 + $0x4c0] sm:$0xff]
        %v388 = vld [vmem:[#allocation7 + $0x4c8] sm:$0xff]
        %v389 = vld [vmem:[#allocation7 + $0x4d0] sm:$0xff]
        %v390 = vld [vmem:[#allocation7 + $0x4d8] sm:$0xff]
        %v391 = vld [vmem:[#allocation7 + $0x4e0] sm:$0xff]
        %v392 = vld [vmem:[#allocation7 + $0x4e8] sm:$0xff]
        %v393 = vld [vmem:[#allocation7 + $0x4f0] sm:$0xff]
        %v394 = vld [vmem:[#allocation7 + $0x4f8] sm:$0xff]
        %v395 = vld [vmem:[#allocation7 + $0x500] sm:$0xff]
        %v396 = vld [vmem:[#allocation7 + $0x508] sm:$0xff]
        %v397 = vld [vmem:[#allocation7 + $0x510] sm:$0xff]
        %v398 = vld [vmem:[#allocation7 + $0x518] sm:$0xff]
        %v399 = vld [vmem:[#allocation7 + $0x520] sm:$0xff]
        %v400 = vld [vmem:[#allocation7 + $0x528] sm:$0xff]
        %v401 = vld [vmem:[#allocation7 + $0x530] sm:$0xff]
        %v402 = vld [vmem:[#allocation7 + $0x538] sm:$0xff]
        %v403 = vld [vmem:[#allocation7 + $0x540] sm:$0xff]
        %v404 = vld [vmem:[#allocation7 + $0x548] sm:$0xff]
        %v405 = vld [vmem:[#allocation7 + $0x550] sm:$0xff]
        %v406 = vld [vmem:[#allocation7 + $0x558] sm:$0xff]
        %v407 = vld [vmem:[#allocation7 + $0x560] sm:$0xff]
        %v408 = vld [vmem:[#allocation7 + $0x568] sm:$0xff]
        %v409 = vld [vmem:[#allocation7 + $0x570] sm:$0xff]
        %v410 = vld [vmem:[#allocation7 + $0x578] sm:$0xff]
        %v411 = vld [vmem:[#allocation7 + $0x580] sm:$0xff]
        %v412 = vld [vmem:[#allocation7 + $0x588] sm:$0xff]
        %v413 = vld [vmem:[#allocation7 + $0x590] sm:$0xff]
        %v414 = vld [vmem:[#allocation7 + $0x598] sm:$0xff]
        %v415 = vld [vmem:[#allocation7 + $0x5a0] sm:$0xff]
        %v416 = vld [vmem:[#allocation7 + $0x5a8] sm:$0xff]
        %v417 = vld [vmem:[#allocation7 + $0x5b0] sm:$0xff]
        %v418 = vld [vmem:[#allocation7 + $0x5b8] sm:$0xff]
        %v419 = vld [vmem:[#allocation7 + $0x5c0] sm:$0xff]
        %v420 = vld [vmem:[#allocation7 + $0x5c8] sm:$0xff]
        %v421 = vld [vmem:[#allocation7 + $0x5d0] sm:$0xff]
        %v422 = vld [vmem:[#allocation7 + $0x5d8] sm:$0xff]
        %v423 = vld [vmem:[#allocation7 + $0x5e0] sm:$0xff]
        %v424 = vld [vmem:[#allocation7 + $0x5e8] sm:$0xff]
        %v425 = vld [vmem:[#allocation7 + $0x5f0] sm:$0xff]
        %v426 = vld [vmem:[#allocation7 + $0x5f8] sm:$0xff]
        %v427 = vld [vmem:[#allocation7 + $0x600] sm:$0xff]
        %v428 = vld [vmem:[#allocation7 + $0x608] sm:$0xff]
        %v429 = vld [vmem:[#allocation7 + $0x610] sm:$0xff]
        %v430 = vld [vmem:[#allocation7 + $0x618] sm:$0xff]
        %v431 = vld [vmem:[#allocation7 + $0x620] sm:$0xff]
        %v432 = vld [vmem:[#allocation7 + $0x628] sm:$0xff]
        %v433 = vld [vmem:[#allocation7 + $0x630] sm:$0xff]
        %v434 = vld [vmem:[#allocation7 + $0x638] sm:$0xff]
        %v435 = vld [vmem:[#allocation7 + $0x640] sm:$0xff]
        %v436 = vld [vmem:[#allocation7 + $0x648] sm:$0xff]
        %v437 = vld [vmem:[#allocation7 + $0x650] sm:$0xff]
        %v438 = vld [vmem:[#allocation7 + $0x658] sm:$0xff]
        %v439 = vld [vmem:[#allocation7 + $0x660] sm:$0xff]
        %v440 = vld [vmem:[#allocation7 + $0x668] sm:$0xff]
        %v441 = vld [vmem:[#allocation7 + $0x670] sm:$0xff]
        %v442 = vld [vmem:[#allocation7 + $0x678] sm:$0xff]
        %v443 = vld [vmem:[#allocation7 + $0x680] sm:$0xff]
        %v444 = vld [vmem:[#allocation7 + $0x688] sm:$0xff]
        %v445 = vld [vmem:[#allocation7 + $0x690] sm:$0xff]
        %v446 = vld [vmem:[#allocation7 + $0x698] sm:$0xff]
        %v447 = vld [vmem:[#allocation7 + $0x6a0] sm:$0xff]
        %v448 = vld [vmem:[#allocation7 + $0x6a8] sm:$0xff]
        %v449 = vld [vmem:[#allocation7 + $0x6b0] sm:$0xff]
        %v450 = vld [vmem:[#allocation7 + $0x6b8] sm:$0xff]
        %v451 = vld [vmem:[#allocation7 + $0x6c0] sm:$0xff]
        %v452 = vld [vmem:[#allocation7 + $0x6c8] sm:$0xff]
        %v453 = vld [vmem:[#allocation7 + $0x6d0] sm:$0xff]
        %v454 = vld [vmem:[#allocation7 + $0x6d8] sm:$0xff]
        %v455 = vld [vmem:[#allocation7 + $0x6e0] sm:$0xff]
        %v456 = vld [vmem:[#allocation7 + $0x6e8] sm:$0xff]
        %v457 = vld [vmem:[#allocation7 + $0x6f0] sm:$0xff]
        %v458 = vld [vmem:[#allocation7 + $0x6f8] sm:$0xff]
        %v459 = vld [vmem:[#allocation7 + $0x700] sm:$0xff]
        %v460 = vld [vmem:[#allocation7 + $0x708] sm:$0xff]
        %v461 = vld [vmem:[#allocation7 + $0x710] sm:$0xff]
        %v462 = vld [vmem:[#allocation7 + $0x718] sm:$0xff]
        %v463 = vld [vmem:[#allocation7 + $0x720] sm:$0xff]
        %v464 = vld [vmem:[#allocation7 + $0x728] sm:$0xff]
        %v465 = vld [vmem:[#allocation7 + $0x730] sm:$0xff]
        %v466 = vld [vmem:[#allocation7 + $0x738] sm:$0xff]
        %v467 = vld [vmem:[#allocation7 + $0x740] sm:$0xff]
        %v468 = vld [vmem:[#allocation7 + $0x748] sm:$0xff]
        %v469 = vld [vmem:[#allocation7 + $0x750] sm:$0xff]
        %v470 = vld [vmem:[#allocation7 + $0x758] sm:$0xff]
        %v471 = vld [vmem:[#allocation7 + $0x760] sm:$0xff]
        %v472 = vld [vmem:[#allocation7 + $0x768] sm:$0xff]
        %v473 = vld [vmem:[#allocation7 + $0x770] sm:$0xff]
        %v474 = vld [vmem:[#allocation7 + $0x778] sm:$0xff]
        %v475 = vld [vmem:[#allocation7 + $0x780] sm:$0xff]
        %v476 = vld [vmem:[#allocation7 + $0x788] sm:$0xff]
        %v477 = vld [vmem:[#allocation7 + $0x790] sm:$0xff]
        %v478 = vld [vmem:[#allocation7 + $0x798] sm:$0xff]
        %v479 = vld [vmem:[#allocation7 + $0x7a0] sm:$0xff]
        %v480 = vld [vmem:[#allocation7 + $0x7a8] sm:$0xff]
        %v481 = vld [vmem:[#allocation7 + $0x7b0] sm:$0xff]
        %v482 = vld [vmem:[#allocation7 + $0x7b8] sm:$0xff]
        %v483 = vld [vmem:[#allocation7 + $0x7c0] sm:$0xff]
        %v484 = vld [vmem:[#allocation7 + $0x7c8] sm:$0xff]
        %v485 = vld [vmem:[#allocation7 + $0x7d0] sm:$0xff]
        %v486 = vld [vmem:[#allocation7 + $0x7d8] sm:$0xff]
        %v487 = vld [vmem:[#allocation7 + $0x7e0] sm:$0xff]
        %v488 = vld [vmem:[#allocation7 + $0x7e8] sm:$0xff]
        %v489 = vld [vmem:[#allocation7 + $0x7f0] sm:$0xff]
        %v490 = vld [vmem:[#allocation7 + $0x7f8] sm:$0xff]
        %v493 = vunpack.c.l.s4 1983009808
        %v494 = vunpack.c.0.s8 %v493
        %v495 = vlaneseq
        %v496 = vshrl.u32 %v495, 7
        %v497 = vsub.s32 %v494, %v496
        %v498 = vrot.slane %v231, %v497
        %v499 = vcombine.high %v498, %v498
        %502 = vmatprep.subr.mxu0 %v236
        %503 = vmatpush1.msra.mxu0 %v235
        %504 = vmatprep.subr.mxu0 %v244
        %505 = vmatpush1.msra.mxu0 %v243
        %506 = vmatprep.subr.mxu0 %v252
        %507 = vmatpush1.msra.mxu0 %v251
        %508 = vmatprep.subr.mxu0 %v260
        %509 = vmatpush1.msra.mxu0 %v259
        %510 = vmatprep.subr.mxu0 %v268
        %511 = vmatpush1.msra.mxu0 %v267
        %512 = vmatprep.subr.mxu0 %v276
        %513 = vmatpush1.msra.mxu0 %v275
        %514 = vmatprep.subr.mxu0 %v284
        %515 = vmatpush1.msra.mxu0 %v283
        %516 = vmatprep.subr.mxu0 %v292
        %517 = vmatpush1.msra.mxu0 %v291
        %518 = vmatprep.subr.mxu0 %v300
        %519 = vmatpush1.msra.mxu0 %v299
        %520 = vmatprep.subr.mxu0 %v308
        %521 = vmatpush1.msra.mxu0 %v307
        %522 = vmatprep.subr.mxu0 %v316
        %523 = vmatpush1.msra.mxu0 %v315
        %524 = vmatprep.subr.mxu0 %v324
        %525 = vmatpush1.msra.mxu0 %v323
        %526 = vmatprep.subr.mxu0 %v332
        %527 = vmatpush1.msra.mxu0 %v331
        %528 = vmatprep.subr.mxu0 %v340
        %529 = vmatpush1.msra.mxu0 %v339
        %530 = vmatprep.subr.mxu0 %v348
        %531 = vmatpush1.msra.mxu0 %v347
        %532 = vmatprep.subr.mxu0 %v356
        %533 = vmatpush1.msra.mxu0 %v355
        %534 = vmatprep.subr.mxu0 %v364
        %535 = vmatpush1.msra.mxu0 %v363
        %536 = vmatprep.subr.mxu0 %v372
        %537 = vmatpush1.msra.mxu0 %v371
        %538 = vmatprep.subr.mxu0 %v380
        %539 = vmatpush1.msra.mxu0 %v379
        %540 = vmatprep.subr.mxu0 %v388
        %541 = vmatpush1.msra.mxu0 %v387
        %542 = vmatprep.subr.mxu0 %v396
        %543 = vmatpush1.msra.mxu0 %v395
        %544 = vmatprep.subr.mxu0 %v404
        %545 = vmatpush1.msra.mxu0 %v403
        %546 = vmatprep.subr.mxu0 %v412
        %547 = vmatpush1.msra.mxu0 %v411
        %548 = vmatprep.subr.mxu0 %v420
        %549 = vmatpush1.msra.mxu0 %v419
        %550 = vmatprep.subr.mxu0 %v428
        %551 = vmatpush1.msra.mxu0 %v427
        %552 = vmatprep.subr.mxu0 %v436
        %553 = vmatpush1.msra.mxu0 %v435
        %554 = vmatprep.subr.mxu0 %v444
        %555 = vmatpush1.msra.mxu0 %v443
        %556 = vmatprep.subr.mxu0 %v452
        %557 = vmatpush1.msra.mxu0 %v451
        %558 = vmatprep.subr.mxu0 %v460
        %559 = vmatpush1.msra.mxu0 %v459
        %560 = vmatprep.subr.mxu0 %v468
        %561 = vmatpush1.msra.mxu0 %v467
        %562 = vmatprep.subr.mxu0 %v476
        %563 = vmatpush1.msra.mxu0 %v475
        %564 = vmatprep.subr.mxu0 %v484
        %565 = vmatpush1.msra.mxu0 %v483
        %566 = vmatprep.mubr.f32.mxu0 %v499
        %567 = vmatmul.mubr.f32.gmra.mrb[0].mxu0 %v498
        %v568 = vpop.f32.mrb[0].mxu0
        %v569 = vadd.f32 0.0, %v568
        %v570 = vpop.f32.mrb[0].mxu0
        %v571 = vadd.f32 0.0, %v570
        %572 = vdwg.mxu0
        %573 = vmatprep.subr.mxu0 %v238
        %574 = vmatpush1.msra.mxu0 %v237
        %575 = vmatprep.subr.mxu0 %v246
        %576 = vmatpush1.msra.mxu0 %v245
        %577 = vmatprep.subr.mxu0 %v254
        %578 = vmatpush1.msra.mxu0 %v253
        %579 = vmatprep.subr.mxu0 %v262
        %580 = vmatpush1.msra.mxu0 %v261
        %581 = vmatprep.subr.mxu0 %v270
        %582 = vmatpush1.msra.mxu0 %v269
        %583 = vmatprep.subr.mxu0 %v278
        %584 = vmatpush1.msra.mxu0 %v277
        %585 = vmatprep.subr.mxu0 %v286
        %586 = vmatpush1.msra.mxu0 %v285
        %587 = vmatprep.subr.mxu0 %v294
        %588 = vmatpush1.msra.mxu0 %v293
        %589 = vmatprep.subr.mxu0 %v302
        %590 = vmatpush1.msra.mxu0 %v301
        %591 = vmatprep.subr.mxu0 %v310
        %592 = vmatpush1.msra.mxu0 %v309
        %593 = vmatprep.subr.mxu0 %v318
        %594 = vmatpush1.msra.mxu0 %v317
        %595 = vmatprep.subr.mxu0 %v326
        %596 = vmatpush1.msra.mxu0 %v325
        %597 = vmatprep.subr.mxu0 %v334
        %598 = vmatpush1.msra.mxu0 %v333
        %599 = vmatprep.subr.mxu0 %v342
        %600 = vmatpush1.msra.mxu0 %v341
        %601 = vmatprep.subr.mxu0 %v350
        %602 = vmatpush1.msra.mxu0 %v349
        %603 = vmatprep.subr.mxu0 %v358
        %604 = vmatpush1.msra.mxu0 %v357
        %605 = vmatprep.subr.mxu0 %v366
        %606 = vmatpush1.msra.mxu0 %v365
        %607 = vmatprep.subr.mxu0 %v374
        %608 = vmatpush1.msra.mxu0 %v373
        %609 = vmatprep.subr.mxu0 %v382
        %610 = vmatpush1.msra.mxu0 %v381
        %611 = vmatprep.subr.mxu0 %v390
        %612 = vmatpush1.msra.mxu0 %v389
        %613 = vmatprep.subr.mxu0 %v398
        %614 = vmatpush1.msra.mxu0 %v397
        %615 = vmatprep.subr.mxu0 %v406
        %616 = vmatpush1.msra.mxu0 %v405
        %617 = vmatprep.subr.mxu0 %v414
        %618 = vmatpush1.msra.mxu0 %v413
        %619 = vmatprep.subr.mxu0 %v422
        %620 = vmatpush1.msra.mxu0 %v421
        %621 = vmatprep.subr.mxu0 %v430
        %622 = vmatpush1.msra.mxu0 %v429
        %623 = vmatprep.subr.mxu0 %v438
        %624 = vmatpush1.msra.mxu0 %v437
        %625 = vmatprep.subr.mxu0 %v446
        %626 = vmatpush1.msra.mxu0 %v445
        %627 = vmatprep.subr.mxu0 %v454
        %628 = vmatpush1.msra.mxu0 %v453
        %629 = vmatprep.subr.mxu0 %v462
        %630 = vmatpush1.msra.mxu0 %v461
        %631 = vmatprep.subr.mxu0 %v470
        %632 = vmatpush1.msra.mxu0 %v469
        %633 = vmatprep.subr.mxu0 %v478
        %634 = vmatpush1.msra.mxu0 %v477
        %635 = vmatprep.subr.mxu0 %v486
        %636 = vmatpush1.msra.mxu0 %v485
        %637 = vmatprep.mubr.f32.mxu0 %v499
        %638 = vmatmul.mubr.f32.gmra.mrb[0].mxu0 %v498
        %v639 = vpop.f32.mrb[0].mxu0
        %v640 = vadd.f32 0.0, %v639
        %v641 = vpop.f32.mrb[0].mxu0
        %v642 = vadd.f32 0.0, %v641
        %643 = vdwg.mxu0
        %644 = vmatprep.subr.mxu0 %v240
        %645 = vmatpush1.msra.mxu0 %v239
        %646 = vmatprep.subr.mxu0 %v248
        %647 = vmatpush1.msra.mxu0 %v247
        %648 = vmatprep.subr.mxu0 %v256
        %649 = vmatpush1.msra.mxu0 %v255
        %650 = vmatprep.subr.mxu0 %v264
        %651 = vmatpush1.msra.mxu0 %v263
        %652 = vmatprep.subr.mxu0 %v272
        %653 = vmatpush1.msra.mxu0 %v271
        %654 = vmatprep.subr.mxu0 %v280
        %655 = vmatpush1.msra.mxu0 %v279
        %656 = vmatprep.subr.mxu0 %v288
        %657 = vmatpush1.msra.mxu0 %v287
        %658 = vmatprep.subr.mxu0 %v296
        %659 = vmatpush1.msra.mxu0 %v295
        %660 = vmatprep.subr.mxu0 %v304
        %661 = vmatpush1.msra.mxu0 %v303
        %662 = vmatprep.subr.mxu0 %v312
        %663 = vmatpush1.msra.mxu0 %v311
        %664 = vmatprep.subr.mxu0 %v320
        %665 = vmatpush1.msra.mxu0 %v319
        %666 = vmatprep.subr.mxu0 %v328
        %667 = vmatpush1.msra.mxu0 %v327
        %668 = vmatprep.subr.mxu0 %v336
        %669 = vmatpush1.msra.mxu0 %v335
        %670 = vmatprep.subr.mxu0 %v344
        %671 = vmatpush1.msra.mxu0 %v343
        %672 = vmatprep.subr.mxu0 %v352
        %673 = vmatpush1.msra.mxu0 %v351
        %674 = vmatprep.subr.mxu0 %v360
        %675 = vmatpush1.msra.mxu0 %v359
        %676 = vmatprep.subr.mxu0 %v368
        %677 = vmatpush1.msra.mxu0 %v367
        %678 = vmatprep.subr.mxu0 %v376
        %679 = vmatpush1.msra.mxu0 %v375
        %680 = vmatprep.subr.mxu0 %v384
        %681 = vmatpush1.msra.mxu0 %v383
        %682 = vmatprep.subr.mxu0 %v392
        %683 = vmatpush1.msra.mxu0 %v391
        %684 = vmatprep.subr.mxu0 %v400
        %685 = vmatpush1.msra.mxu0 %v399
        %686 = vmatprep.subr.mxu0 %v408
        %687 = vmatpush1.msra.mxu0 %v407
        %688 = vmatprep.subr.mxu0 %v416
        %689 = vmatpush1.msra.mxu0 %v415
        %690 = vmatprep.subr.mxu0 %v424
        %691 = vmatpush1.msra.mxu0 %v423
        %692 = vmatprep.subr.mxu0 %v432
        %693 = vmatpush1.msra.mxu0 %v431
        %694 = vmatprep.subr.mxu0 %v440
        %695 = vmatpush1.msra.mxu0 %v439
        %696 = vmatprep.subr.mxu0 %v448
        %697 = vmatpush1.msra.mxu0 %v447
        %698 = vmatprep.subr.mxu0 %v456
        %699 = vmatpush1.msra.mxu0 %v455
        %700 = vmatprep.subr.mxu0 %v464
        %701 = vmatpush1.msra.mxu0 %v463
        %702 = vmatprep.subr.mxu0 %v472
        %703 = vmatpush1.msra.mxu0 %v471
        %704 = vmatprep.subr.mxu0 %v480
        %705 = vmatpush1.msra.mxu0 %v479
        %706 = vmatprep.subr.mxu0 %v488
        %707 = vmatpush1.msra.mxu0 %v487
        %708 = vmatprep.mubr.f32.mxu0 %v499
        %709 = vmatmul.mubr.f32.gmra.mrb[0].mxu0 %v498
        %v710 = vpop.f32.mrb[0].mxu0
        %v711 = vadd.f32 0.0, %v710
        %v712 = vpop.f32.mrb[0].mxu0
        %v713 = vadd.f32 0.0, %v712
        %714 = vdwg.mxu0
        %715 = vmatprep.subr.mxu0 %v242
        %716 = vmatpush1.msra.mxu0 %v241
        %717 = vmatprep.subr.mxu0 %v250
        %718 = vmatpush1.msra.mxu0 %v249
        %719 = vmatprep.subr.mxu0 %v258
        %720 = vmatpush1.msra.mxu0 %v257
        %721 = vmatprep.subr.mxu0 %v266
        %722 = vmatpush1.msra.mxu0 %v265
        %723 = vmatprep.subr.mxu0 %v274
        %724 = vmatpush1.msra.mxu0 %v273
        %725 = vmatprep.subr.mxu0 %v282
        %726 = vmatpush1.msra.mxu0 %v281
        %727 = vmatprep.subr.mxu0 %v290
        %728 = vmatpush1.msra.mxu0 %v289
        %729 = vmatprep.subr.mxu0 %v298
        %730 = vmatpush1.msra.mxu0 %v297
        %731 = vmatprep.subr.mxu0 %v306
        %732 = vmatpush1.msra.mxu0 %v305
        %733 = vmatprep.subr.mxu0 %v314
        %734 = vmatpush1.msra.mxu0 %v313
        %735 = vmatprep.subr.mxu0 %v322
        %736 = vmatpush1.msra.mxu0 %v321
        %737 = vmatprep.subr.mxu0 %v330
        %738 = vmatpush1.msra.mxu0 %v329
        %739 = vmatprep.subr.mxu0 %v338
        %740 = vmatpush1.msra.mxu0 %v337
        %741 = vmatprep.subr.mxu0 %v346
        %742 = vmatpush1.msra.mxu0 %v345
        %743 = vmatprep.subr.mxu0 %v354
        %744 = vmatpush1.msra.mxu0 %v353
        %745 = vmatprep.subr.mxu0 %v362
        %746 = vmatpush1.msra.mxu0 %v361
        %747 = vmatprep.subr.mxu0 %v370
        %748 = vmatpush1.msra.mxu0 %v369
        %749 = vmatprep.subr.mxu0 %v378
        %750 = vmatpush1.msra.mxu0 %v377
        %751 = vmatprep.subr.mxu0 %v386
        %752 = vmatpush1.msra.mxu0 %v385
        %753 = vmatprep.subr.mxu0 %v394
        %754 = vmatpush1.msra.mxu0 %v393
        %755 = vmatprep.subr.mxu0 %v402
        %756 = vmatpush1.msra.mxu0 %v401
        %757 = vmatprep.subr.mxu0 %v410
        %758 = vmatpush1.msra.mxu0 %v409
        %759 = vmatprep.subr.mxu0 %v418
        %760 = vmatpush1.msra.mxu0 %v417
        %761 = vmatprep.subr.mxu0 %v426
        %762 = vmatpush1.msra.mxu0 %v425
        %763 = vmatprep.subr.mxu0 %v434
        %764 = vmatpush1.msra.mxu0 %v433
        %765 = vmatprep.subr.mxu0 %v442
        %766 = vmatpush1.msra.mxu0 %v441
        %767 = vmatprep.subr.mxu0 %v450
        %768 = vmatpush1.msra.mxu0 %v449
        %769 = vmatprep.subr.mxu0 %v458
        %770 = vmatpush1.msra.mxu0 %v457
        %771 = vmatprep.subr.mxu0 %v466
        %772 = vmatpush1.msra.mxu0 %v465
        %773 = vmatprep.subr.mxu0 %v474
        %774 = vmatpush1.msra.mxu0 %v473
        %775 = vmatprep.subr.mxu0 %v482
        %776 = vmatpush1.msra.mxu0 %v481
        %777 = vmatprep.subr.mxu0 %v490
        %778 = vmatpush1.msra.mxu0 %v489
        %779 = vmatprep.mubr.f32.mxu0 %v499
        %780 = vmatmul.mubr.f32.gmra.mrb[0].mxu0 %v498
        %v781 = vpop.f32.mrb[0].mxu0
        %v782 = vadd.f32 0.0, %v781
        %v783 = vpop.f32.mrb[0].mxu0
        %v784 = vadd.f32 0.0, %v783
        %785 = vdwg.mxu0
        %v794 = vcombine.low %v569, %v571
        %v795 = vcombine.low %v640, %v642
        %v797 = vunpack.c.l.s4 1983009808
        %v798 = vunpack.c.0.s8 %v797
        %v799 = vlaneseq
        %v800 = vshrl.u32 %v799, 7
        %v801 = vsub.s32 %v798, %v800
        %v802 = vrot.slane %v794, %v801
        %v804 = vunpack.c.l.s4 1983009808
        %v805 = vunpack.c.0.s8 %v804
        %v806 = vlaneseq
        %v807 = vshrl.u32 %v806, 7
        %v808 = vsub.s32 %v805, %v807
        %v809 = vrot.slane %v795, %v808
        %v810 = vcombine.low %v802, %v809
        %v811 = vcombine.low %v711, %v713
        %v812 = vcombine.low %v782, %v784
        %v814 = vunpack.c.l.s4 1983009808
        %v815 = vunpack.c.0.s8 %v814
        %v816 = vlaneseq
        %v817 = vshrl.u32 %v816, 7
        %v818 = vsub.s32 %v815, %v817
        %v819 = vrot.slane %v811, %v818
        %v821 = vunpack.c.l.s4 1983009808
        %v822 = vunpack.c.0.s8 %v821
        %v823 = vlaneseq
        %v824 = vshrl.u32 %v823, 7
        %v825 = vsub.s32 %v822, %v824
        %v826 = vrot.slane %v812, %v825
        %v827 = vcombine.low %v819, %v826
        %v830 = vadd.f32 %v233, %v810
        %v831 = vadd.f32 %v234, %v827
        %v832 = vxor.u32 %v830, 2147483648
        %v833 = vmul.f32 %v832, 1.442695
        %v834 = vpow.pop %v833
        %v835 = vadd.f32 %v834, 1.0
        %v836 = vrcp.pop %v835
        %v837 = vmul.f32 1.0, %v836
        %v839 = vrot.slane %v830, 4
        %v841 = vxor.u32 %v839, 2147483648
        %v842 = vmul.f32 %v841, 1.442695
        %v843 = vpow.pop %v842
        %v844 = vadd.f32 %v843, 1.0
        %v845 = vrcp.pop %v844
        %v846 = vmul.f32 1.0, %v845
        %v847 = vtanh.pop %v831
        %v849 = vrot.slane %v831, 4
        %v851 = vxor.u32 %v849, 2147483648
        %v852 = vmul.f32 %v851, 1.442695
        %v853 = vpow.pop %v852
        %v854 = vadd.f32 %v853, 1.0
        %v855 = vrcp.pop %v854
        %v856 = vmul.f32 1.0, %v855
        %v857 = vmul.f32 %v846, %v232
        %v858 = vmul.f32 %v837, %v847
        %v859 = vadd.f32 %v857, %v858
        %v860 = vtanh.pop %v859
        %v861 = vmul.f32 %v856, %v860
        %862 = vst [vmem:[#allocation3] sm:$0xf] %v859
        %863 = vst [vmem:[#allocation2] sm:$0xf] %v861
        %864 = vst [vmem:[%s220] sm:$0xf] %v861
        %865 = vst [vmem:[#allocation10] sm:$0xf] %v861
        %866 = vst [vmem:[#allocation12] sm:$0xf] %v859
        %s867 = sand.u32 %s79, 1
        %s868 = scalar_lea.sflag [#allocation6], %s867
        %s869 = sand.u32 %s79, 1
        %s870 = smul.addr %s869, 4
        %s871 = scalar_lea.vmem [#allocation9], %s870
        // Predicated region
        $region41: #{lstm_forward.7} parent=27 // pred_check
          %p872 = pneg %p89
        $region42: #{lstm_forward.7} parent=27 // pred_check_branch
          %874 = sbr.rel (%p872) target = $region44
        $region43: #{lstm_forward.7} parent=27 // pred_region
          %s876 = ssub.s32 64, 64
          %877 = vsyncadd %s868, %s876
          %s878 = smul.addr %s24, 2
          %s879 = smul.addr %s878, 32
          %s880 = scalar_lea.hbm %s2, %s879
          %s882 = sshll.u32 %s871, 4
          %s883 = int_to_ptr.vmem [resolvable:$true] %s882
          %885 = dma.vmem_to_hbm [thread:$0]  %s883, 64, %s880, %s868
        $region44: #{lstm_forward.7} parent=27 // pred_fallthru
          _
        // Predicated region
        $region45: #{lstm_forward.7} parent=27 // pred_check
          %p886 = pneg %p110
        $region46: #{lstm_forward.7} parent=27 // pred_check_branch
          %888 = sbr.rel (%p886) target = $region48
        $region47: #{lstm_forward.7} parent=27 // pred_region
          %s890 = ssub.s32 64, 64
          %891 = vsyncadd [#allocation11], %s890
          %s893 = sshll.u32 [#allocation10], 4
          %s894 = int_to_ptr.vmem [resolvable:$true] %s893
          %896 = dma.vmem_to_hbm [thread:$0]  %s894, 64, %s3, [#allocation11]
        $region48: #{lstm_forward.7} parent=27 // pred_fallthru
          _
        // Predicated region
        $region49: #{lstm_forward.7} parent=27 // pred_check
          %p897 = pneg %p131
        $region50: #{lstm_forward.7} parent=27 // pred_check_branch
          %899 = sbr.rel (%p897) target = $region52
        $region51: #{lstm_forward.7} parent=27 // pred_region
          %s901 = ssub.s32 64, 64
          %902 = vsyncadd [#allocation11], %s901
          %s904 = sshll.u32 [#allocation12], 4
          %s905 = int_to_ptr.vmem [resolvable:$true] %s904
          %907 = dma.vmem_to_hbm [thread:$0]  %s905, 64, %s4, [#allocation11]
        $region52: #{lstm_forward.7} parent=27 // pred_fallthru
          _
        // Predicated region
        $region53: #{lstm_forward.7} parent=27 // pred_check
          %p908 = pneg %p110
        $region54: #{lstm_forward.7} parent=27 // pred_check_branch
          %910 = sbr.rel (%p908) target = $region56
        $region55: #{lstm_forward.7} parent=27 // pred_region
          %911 = dma.done [#allocation11], 64
        $region56: #{lstm_forward.7} parent=27 // pred_fallthru
          _
        // Predicated region
        $region57: #{lstm_forward.7} parent=27 // pred_check
          %p912 = pneg %p131
        $region58: #{lstm_forward.7} parent=27 // pred_check_branch
          %914 = sbr.rel (%p912) target = $region60
        $region59: #{lstm_forward.7} parent=27 // pred_region
          %915 = dma.done [#allocation11], 64
        $region60: #{lstm_forward.7} parent=27 // pred_fallthru
          _
      $region28: #{lstm_forward.7} parent=5 // pred_fallthru
        _
      %p916 = scmp.le.s32.totalorder 2, %s19
      // Predicated region
      $region61: #{lstm_forward.7} parent=5 // pred_check
        %p917 = pneg %p916
      $region62: #{lstm_forward.7} parent=5 // pred_check_branch
        %919 = sbr.rel (%p917) target = $region64
      $region63: #{lstm_forward.7} parent=5 // pred_region
        %s920 = ssub.s32 %s19, 2
        // Predicated region
        $region65: #{lstm_forward.7} parent=63 // pred_check
          %p921 = pneg %p95
        $region66: #{lstm_forward.7} parent=63 // pred_check_branch
          %923 = sbr.rel (%p921) target = $region68
        $region67: #{lstm_forward.7} parent=63 // pred_region
          %s924 = sand.u32 %s80, 1
          %s925 = scalar_lea.sflag [#allocation6], %s924
          %s926 = sand.u32 %s80, 1
          %s927 = smul.addr %s926, 4
          %s928 = scalar_lea.vmem [#allocation9], %s927
          %929 = dma.done %s925, 64
        $region68: #{lstm_forward.7} parent=63 // pred_fallthru
          _
      $region64: #{lstm_forward.7} parent=5 // pred_fallthru
        _
    $region6: #{lstm_forward.7} parent=1 // loop_footer
      %s23 = sadd.s32 1, %s19
    $region7: #{lstm_forward.7} parent=1 // loop_footer_branch
      %18 = sbr.rel target = $region3
    $region8: #{lstm_forward.7} parent=1 // loop_exit
      _
    %930 = vsyncpa [#allocation5], 1
    %s931 = scalar_lea.sflag [#allocation5], 1
    %932 = vsyncpa %s931, 1
    %933 = vsyncpa [#allocation8], 1
    %934 = vsyncpa [#allocation6], 1
    %s935 = scalar_lea.sflag [#allocation6], 1
    %936 = vsyncpa %s935, 1
    %937 = vsyncpa [#allocation11], 1

</llo_original>
